<compile_context>
chip_gen: v5e
topology: v5e:2x2
jax: 0.10.0
libtpu: 0.0.40
codegen_flags: <defaults>
</compile_context>

<pallas_src>
import functools

import jax
import jax.numpy as jnp
from jax.experimental import pallas as pl
from jax.experimental.pallas import tpu as pltpu

LANE = 128      # vreg lane width: each gate's H is padded to a multiple of this
SUBLANE = 8     # f32 sublane count: batch is padded to a multiple of this


def _round_up(x, m):
    return (x + m - 1) // m * m


def _sigmoid_via_tanh(x):
    # Exact identity: sigmoid(x) = 0.5 * tanh(0.5 * x) + 0.5.  tanh hits the
    # EUP directly; avoids the exp + full-divide chain of jax.nn.sigmoid.
    return 0.5 * jnp.tanh(0.5 * x) + 0.5


# ---------------------------------------------------------------------------
# Kernel
# ---------------------------------------------------------------------------
def lstm_classifier_kernel(x_ref, wih_ref, whh_ref, b_ref, wfc_ref, bfc_ref,
                           out_ref, h_sc, c_sc, pg_sc, *, t_total, unroll):
    """Grid = (batch_block [parallel], time_chunk [arbitrary, sequential]).

    One grid step processes a whole chunk of timesteps: the input projection
    is done in one matmul before the loop, then an in-kernel fori_loop runs
    the recurrence with (h, c) carried in vregs (persisted in VMEM scratch
    across chunks).
    """
    chunk = pl.program_id(1)
    Tc, Bb, E = x_ref.shape          # chunk length, batch block, embedding dim
    Hp = h_sc.shape[-1]              # padded hidden size (multiple of 128)

    @pl.when(chunk == 0)
    def _():
        h_sc[...] = jnp.zeros_like(h_sc)
        c_sc[...] = jnp.zeros_like(c_sc)

    # ---- Hoisted input projection: one MXU matmul for the whole chunk ------
    # (Tc*Bb, E) @ (E, 4*Hp) with bf16 operands, f32 accumulation; bias added
    # once here (removed from the per-step critical path).
    x_flat = x_ref[...].reshape(Tc * Bb, E).astype(jnp.bfloat16)
    pg = jnp.dot(x_flat, wih_ref[...], preferred_element_type=jnp.float32)
    pg_sc[...] = pg.reshape(Tc, Bb, 4 * Hp) + b_ref[...]      # bias broadcast

    w_hh = whh_ref[...]              # (Hp, 4*Hp) bf16, loop-invariant

    def step(t, carry):
        h, c = carry
        gates = pg_sc[t] + jnp.dot(h.astype(jnp.bfloat16), w_hh,
                                   preferred_element_type=jnp.float32)
        # Lane-aligned gate slices (Hp % 128 == 0), PyTorch order i, f, g, o.
        i = _sigmoid_via_tanh(gates[:, 0 * Hp:1 * Hp])
        f = _sigmoid_via_tanh(gates[:, 1 * Hp:2 * Hp])
        g = jnp.tanh(gates[:, 2 * Hp:3 * Hp])
        o = _sigmoid_via_tanh(gates[:, 3 * Hp:4 * Hp])
        c_new = f * c + i * g
        h_new = o * jnp.tanh(c_new)
        return h_new, c_new

    carry0 = (h_sc[...], c_sc[...])
    if t_total % Tc == 0:
        # All chunks are full: static trip count, unrollable.
        h_fin, c_fin = jax.lax.fori_loop(0, Tc, step, carry0, unroll=unroll)
    else:
        # Tail chunk: dynamic trip count (padded timesteps never executed).
        steps = jnp.minimum(Tc, t_total - chunk * Tc)
        h_fin, c_fin = jax.lax.fori_loop(0, steps, step, carry0)

    h_sc[...] = h_fin
    c_sc[...] = c_fin

    @pl.when(chunk == pl.num_programs(1) - 1)
    def _():
        # hidden[-1] -> dropout (identity, eval) -> fc -> sigmoid
        logits = (jnp.dot(h_fin.astype(jnp.bfloat16), wfc_ref[...],
                          preferred_element_type=jnp.float32) + bfc_ref[...])
        out_ref[...] = _sigmoid_via_tanh(logits).astype(out_ref.dtype)


# ---------------------------------------------------------------------------
# Wrapper
# ---------------------------------------------------------------------------
def lstm_classifier_forward(tokens, params, *, chunk_budget_bytes=24 << 20):
    """tokens: (B, T) int32; returns (B, output_dim) float32 probabilities."""
    emb_table = params["embedding"]      # (V, E) f32, padding_idx row is zero
    w_ih = params["w_ih"]                # (E,  4*Hp) bf16
    w_hh = params["w_hh"]                # (Hp, 4*Hp) bf16
    b = params["b"]                      # (1,  4*Hp) f32
    w_fc = params["w_fc"]                # (Hp, OP)   bf16 (OP = O padded to 128)
    b_fc = params["b_fc"]                # (1,  OP)   f32
    O = params["output_dim"]

    B, T = tokens.shape
    E = emb_table.shape[1]
    Hp = w_hh.shape[0]
    OP = w_fc.shape[1]

    # Batch padding; split into 2 "parallel" batch blocks when big enough so
    # v7x's two TensorCores each run an independent recurrence shard.
    B_pad = _round_up(max(B, SUBLANE), SUBLANE)
    if B_pad >= 2 * SUBLANE:
        B_blk = _round_up(-(-B_pad // 2), SUBLANE)
        B_pad = 2 * B_blk
        nb = 2
    else:
        B_blk = B_pad
        nb = 1

    # Embedding lookup + time-major layout (plain-JAX glue).
    embedded = jnp.take(emb_table, tokens, axis=0).astype(jnp.float32)  # (B,T,E)
    embedded = jnp.transpose(embedded, (1, 0, 2))                       # (T,B,E)
    if B_pad != B:
        embedded = jnp.pad(embedded, ((0, 0), (0, B_pad - B), (0, 0)))

    # Time-chunk size budgeted against VMEM.  Per timestep the footprint is
    # dominated by the f32 pre-gate scratch (+ its matmul intermediate) plus
    # the double-buffered x block.
    per_step = 2 * (B_blk * 4 * Hp * 4) + 2 * (B_blk * E * 4)
    max_steps = max(1, chunk_budget_bytes // per_step)
    Tc = min(T, max_steps)
    num_chunks = -(-T // Tc)
    T_padded = num_chunks * Tc
    if T_padded != T:   # zero-pad the time axis; padded steps are never looped
        embedded = jnp.pad(embedded, ((0, T_padded - T), (0, 0), (0, 0)))

    # Bias pre-broadcast once (hoisted out of the kernel's time loop).
    bias = jnp.broadcast_to(b, (B_blk, b.shape[1])).astype(jnp.float32)

    unroll = True if Tc <= 16 else 4
    kernel = functools.partial(lstm_classifier_kernel, t_total=T, unroll=unroll)

    # Explicit VMEM accounting (inputs double-buffered, pre-gate scratch plus
    # matmul intermediate), capped for v7x's 64 MiB physical VMEM.
    vmem_bytes = (
        2 * Tc * B_blk * 4 * Hp * 4            # pre-gate scratch + temp
        + 2 * Tc * B_blk * E * 4               # x chunk (double-buffered)
        + 2 * (w_ih.size * 2 + w_hh.size * 2 + w_fc.size * 2)
        + 2 * (bias.size * 4 + b_fc.size * 4)
        + 2 * B_blk * Hp * 4                   # h / c state
        + 2 * B_blk * OP * 4                   # output block
    )
    vmem_limit = int(min(max(int(vmem_bytes * 1.25) + (2 << 20), 16 << 20),
                         40 << 20))

    out = pl.pallas_call(
        kernel,
        out_shape=jax.ShapeDtypeStruct((B_pad, OP), jnp.float32),
        grid_spec=pltpu.PrefetchScalarGridSpec(
            num_scalar_prefetch=0,
            grid=(nb, num_chunks),
            in_specs=[
                pl.BlockSpec((Tc, B_blk, E), lambda bb, c: (c, bb, 0)),    # x
                pl.BlockSpec((E, 4 * Hp), lambda bb, c: (0, 0)),           # W_ih
                pl.BlockSpec((Hp, 4 * Hp), lambda bb, c: (0, 0)),          # W_hh
                pl.BlockSpec((B_blk, 4 * Hp), lambda bb, c: (0, 0)),       # bias
                pl.BlockSpec((Hp, OP), lambda bb, c: (0, 0)),              # W_fc
                pl.BlockSpec((1, OP), lambda bb, c: (0, 0)),               # b_fc
            ],
            out_specs=pl.BlockSpec((B_blk, OP), lambda bb, c: (bb, 0)),
            scratch_shapes=[
                pltpu.VMEM((B_blk, Hp), jnp.float32),          # h state
                pltpu.VMEM((B_blk, Hp), jnp.float32),          # c state
                pltpu.VMEM((Tc, B_blk, 4 * Hp), jnp.float32),  # pre-gates
            ],
        ),
        compiler_params=pltpu.CompilerParams(
            dimension_semantics=("parallel", "arbitrary"),
            vmem_limit_bytes=vmem_limit),
    )(embedded, w_ih, w_hh, bias, w_fc, b_fc)

    return out[:B, :O]


# ---------------------------------------------------------------------------
# Parameters (PyTorch layout) + kernel-layout preparation
# ---------------------------------------------------------------------------
def init_params(key, vocab_size, embedding_dim, hidden_dim, output_dim, pad_idx):
    """Parameters in PyTorch layouts matching LSTMClassifier."""
    k_emb, k_ih, k_hh, k_bih, k_bhh, k_fc, k_bfc = jax.random.split(key, 7)
    scale = 0.1
    embedding = scale * jax.random.normal(
        k_emb, (vocab_size, embedding_dim), jnp.float32)
    embedding = embedding.at[pad_idx].set(0.0)   # nn.Embedding(padding_idx=...)
    return {
        "embedding": embedding,
        "weight_ih": scale * jax.random.normal(
            k_ih, (4 * hidden_dim, embedding_dim), jnp.float32),
        "weight_hh": scale * jax.random.normal(
            k_hh, (4 * hidden_dim, hidden_dim), jnp.float32),
        "bias_ih": scale * jax.random.normal(k_bih, (4 * hidden_dim,), jnp.float32),
        "bias_hh": scale * jax.random.normal(k_bhh, (4 * hidden_dim,), jnp.float32),
        "fc_weight": scale * jax.random.normal(
            k_fc, (output_dim, hidden_dim), jnp.float32),
        "fc_bias": scale * jax.random.normal(k_bfc, (output_dim,), jnp.float32),
    }


def prepare_params(pt, hidden_dim):
    """Transpose to (in, out) layout, zero-pad each gate's H to a multiple of
    128 (lane-aligned gate slices), pad the fc output dim to 128 (lane-dense
    store), and store MXU weight operands in bf16.  Zero padding is exact:
    padded gate pre-activations are 0 -> i=f=o=0.5, g=0 -> padded c/h lanes
    stay exactly 0, and padded W_fc rows/columns are zero."""
    H = hidden_dim
    Hp = _round_up(H, LANE)
    O = pt["fc_weight"].shape[0]
    OP = _round_up(O, LANE)

    def pad_gates(w):               # w: (4H, in) -> (in, 4*Hp)
        w = w.reshape(4, H, -1)                         # (4, H, in)
        w = jnp.pad(w, ((0, 0), (0, Hp - H), (0, 0)))   # (4, Hp, in)
        return jnp.transpose(w, (2, 0, 1)).reshape(-1, 4 * Hp)

    w_ih = pad_gates(pt["weight_ih"]).astype(jnp.bfloat16)            # (E,  4*Hp)
    w_hh = pad_gates(pt["weight_hh"])                                 # (H,  4*Hp)
    w_hh = jnp.pad(w_hh, ((0, Hp - H), (0, 0))).astype(jnp.bfloat16)  # (Hp, 4*Hp)

    b = (pt["bias_ih"] + pt["bias_hh"]).reshape(4, H)
    b = jnp.pad(b, ((0, 0), (0, Hp - H))).reshape(1, 4 * Hp)          # (1, 4*Hp)
    b = b.astype(jnp.float32)

    w_fc = jnp.pad(pt["fc_weight"].T,
                   ((0, Hp - H), (0, OP - O))).astype(jnp.bfloat16)   # (Hp, OP)
    b_fc = jnp.pad(pt["fc_bias"].reshape(1, O),
                   ((0, 0), (0, OP - O))).astype(jnp.float32)         # (1, OP)

    return {"embedding": pt["embedding"], "w_ih": w_ih, "w_hh": w_hh,
            "b": b, "w_fc": w_fc, "b_fc": b_fc, "output_dim": O}


# ---------------------------------------------------------------------------
# Pure-JAX reference (PyTorch eval-mode semantics)
# ---------------------------------------------------------------------------
def lstm_classifier_reference(tokens, pt, hidden_dim):
    H = hidden_dim
    emb = jnp.take(pt["embedding"], tokens, axis=0)   # (B, T, E)
    B, T, _ = emb.shape
    w_ih, w_hh = pt["weight_ih"], pt["weight_hh"]
    b = pt["bias_ih"] + pt["bias_hh"]
    h = jnp.zeros((B, H), jnp.float32)
    c = jnp.zeros((B, H), jnp.float32)
    for t in range(T):
        gates = emb[:, t] @ w_ih.T + h @ w_hh.T + b
        i = jax.nn.sigmoid(gates[:, 0 * H:1 * H])
        f = jax.nn.sigmoid(gates[:, 1 * H:2 * H])
        g = jnp.tanh(gates[:, 2 * H:3 * H])
        o = jax.nn.sigmoid(gates[:, 3 * H:4 * H])
        c = f * c + i * g
        h = o * jnp.tanh(c)
    logits = h @ pt["fc_weight"].T + pt["fc_bias"]
    return jax.nn.sigmoid(logits)


if __name__ == "__main__":
    vocab_size = 50
    embedding_dim = 32
    hidden_dim = 32
    output_dim = 2
    pad_idx = 0
    B, T = 2, 8

    key = jax.random.PRNGKey(0)
    k_params, k_tok = jax.random.split(key)
    pt_params = init_params(k_params, vocab_size, embedding_dim, hidden_dim,
                            output_dim, pad_idx)
    params = prepare_params(pt_params, hidden_dim)

    tokens = jax.random.randint(k_tok, (B, T), minval=1, maxval=vocab_size,
                                dtype=jnp.int32)
    # simulate right-padding on the last sequence positions of sample 1
    tokens = tokens.at[1, T - 2:].set(pad_idx)

    out = lstm_classifier_forward(tokens, params)
    out = jax.block_until_ready(out)
    assert out.shape == (B, output_dim)

    ref = lstm_classifier_reference(tokens, pt_params, hidden_dim)
    # bf16 MXU operands with f32 accumulation: slightly looser tolerance.
    assert jnp.allclose(out, ref, atol=1e-2, rtol=1e-2), (out, ref)

    print("KERNEL_OK")
</pallas_src>

<mosaic_0001>
module attributes {stable_mosaic.version = 11 : i64} {
  func.func @lstm_classifier_kernel(%arg0: i32, %arg1: i32, %arg2: memref<8x8x32xf32, #tpu.memory_space<vmem>>, %arg3: memref<32x512xbf16, #tpu.memory_space<vmem>>, %arg4: memref<128x512xbf16, #tpu.memory_space<vmem>>, %arg5: memref<8x512xf32, #tpu.memory_space<vmem>>, %arg6: memref<128x128xbf16, #tpu.memory_space<vmem>>, %arg7: memref<1x128xf32, #tpu.memory_space<vmem>>, %arg8: memref<8x128xf32, #tpu.memory_space<vmem>>, %arg9: memref<8x128xf32, #tpu.memory_space<vmem>>, %arg10: memref<8x128xf32, #tpu.memory_space<vmem>>, %arg11: memref<8x8x512xf32, #tpu.memory_space<vmem>>) attributes {dimension_semantics = [#tpu.dimension_semantics<parallel>, #tpu.dimension_semantics<arbitrary>], iteration_bounds = array<i64: 1, 1>, scalar_prefetch = 0 : i64, scratch_operands = 3 : i64, tpu.core_type = #tpu.core_type<tc>, window_params = [{transform_indices = @transform_0, window_bounds = array<i64: 8, 8, 32>}, {pipeline_mode = #tpu.pipeline_mode<synchronous>, transform_indices = @transform_1, window_bounds = array<i64: 32, 512>}, {pipeline_mode = #tpu.pipeline_mode<synchronous>, transform_indices = @transform_2, window_bounds = array<i64: 128, 512>}, {pipeline_mode = #tpu.pipeline_mode<synchronous>, transform_indices = @transform_3, window_bounds = array<i64: 8, 512>}, {pipeline_mode = #tpu.pipeline_mode<synchronous>, transform_indices = @transform_4, window_bounds = array<i64: 128, 128>}, {pipeline_mode = #tpu.pipeline_mode<synchronous>, transform_indices = @transform_5, window_bounds = array<i64: 1, 128>}, {transform_indices = @transform_6, window_bounds = array<i64: 8, 128>}]} {
    %c0_i32 = arith.constant 0 : i32
    %0 = arith.cmpi eq, %arg1, %c0_i32 : i32
    %1 = arith.extui %0 : i1 to i32
    %c0_i32_0 = arith.constant 0 : i32
    %2 = arith.cmpi ne, %1, %c0_i32_0 : i32
    scf.if %2 {
      %cst_119 = arith.constant 0.000000e+00 : f32
      %318 = vector.broadcast %cst_119 : f32 to vector<8x128xf32>
      %c0_120 = arith.constant 0 : index
      %c0_121 = arith.constant 0 : index
      %319 = vector.load %arg9[%c0_120, %c0_121] : memref<8x128xf32, #tpu.memory_space<vmem>>, vector<8x128xf32>
      tpu.vector_store %arg9[%c0_120, %c0_121], %318 {strides = array<i32>} : memref<8x128xf32, #tpu.memory_space<vmem>>, vector<8x128xf32>,
      %cst_122 = arith.constant 0.000000e+00 : f32
      %320 = vector.broadcast %cst_122 : f32 to vector<8x128xf32>
      %c0_123 = arith.constant 0 : index
      %c0_124 = arith.constant 0 : index
      %321 = vector.load %arg10[%c0_123, %c0_124] : memref<8x128xf32, #tpu.memory_space<vmem>>, vector<8x128xf32>
      tpu.vector_store %arg10[%c0_123, %c0_124], %320 {strides = array<i32>} : memref<8x128xf32, #tpu.memory_space<vmem>>, vector<8x128xf32>,
    } else {
    }
    %c0 = arith.constant 0 : index
    %c0_1 = arith.constant 0 : index
    %c0_2 = arith.constant 0 : index
    %3 = vector.load %arg2[%c0, %c0_1, %c0_2] : memref<8x8x32xf32, #tpu.memory_space<vmem>>, vector<8x8x32xf32>
    %4 = vector.shape_cast %3 : vector<8x8x32xf32> to vector<64x32xf32>
    %5 = arith.truncf %4 : vector<64x32xf32> to vector<64x32xbf16>
    %c0_3 = arith.constant 0 : index
    %c0_4 = arith.constant 0 : index
    %6 = vector.load %arg3[%c0_3, %c0_4] : memref<32x512xbf16, #tpu.memory_space<vmem>>, vector<32x512xbf16>
    %cst = arith.constant dense<0.000000e+00> : vector<64x512xf32>
    %7 = tpu.matmul %5, %6, %cst {dimension_numbers = #tpu.dot_dimension_numbers<[1], [0], [0], [1], [0, 0, 1, 1], [], []>} : vector<64x32xbf16>, vector<32x512xbf16>, vector<64x512xf32> -> vector<64x512xf32>
    %8 = vector.shape_cast %7 : vector<64x512xf32> to vector<8x8x512xf32>
    %c0_5 = arith.constant 0 : index
    %c0_6 = arith.constant 0 : index
    %9 = vector.load %arg5[%c0_5, %c0_6] : memref<8x512xf32, #tpu.memory_space<vmem>>, vector<8x512xf32>
    %10 = vector.shape_cast %9 : vector<8x512xf32> to vector<1x8x512xf32>
    %11 = vector.broadcast %10 : vector<1x8x512xf32> to vector<8x8x512xf32>
    %12 = arith.addf %8, %11 : vector<8x8x512xf32>
    %c0_7 = arith.constant 0 : index
    %c0_8 = arith.constant 0 : index
    %c0_9 = arith.constant 0 : index
    %13 = vector.load %arg11[%c0_7, %c0_8, %c0_9] : memref<8x8x512xf32, #tpu.memory_space<vmem>>, vector<8x8x512xf32>
    tpu.vector_store %arg11[%c0_7, %c0_8, %c0_9], %12 {strides = array<i32>} : memref<8x8x512xf32, #tpu.memory_space<vmem>>, vector<8x8x512xf32>,
    %c0_10 = arith.constant 0 : index
    %c0_11 = arith.constant 0 : index
    %14 = vector.load %arg4[%c0_10, %c0_11] : memref<128x512xbf16, #tpu.memory_space<vmem>>, vector<128x512xbf16>
    %c0_12 = arith.constant 0 : index
    %c0_13 = arith.constant 0 : index
    %15 = vector.load %arg9[%c0_12, %c0_13] : memref<8x128xf32, #tpu.memory_space<vmem>>, vector<8x128xf32>
    %c0_14 = arith.constant 0 : index
    %c0_15 = arith.constant 0 : index
    %16 = vector.load %arg10[%c0_14, %c0_15] : memref<8x128xf32, #tpu.memory_space<vmem>>, vector<8x128xf32>
    %c0_i32_16 = arith.constant 0 : i32
    %17 = arith.index_cast %c0_i32_16 : i32 to index
    %c0_17 = arith.constant 0 : index
    %c0_18 = arith.constant 0 : index
    %18 = vector.load %arg11[%17, %c0_17, %c0_18] : memref<8x8x512xf32, #tpu.memory_space<vmem>>, vector<1x8x512xf32>
    %19 = vector.shape_cast %18 : vector<1x8x512xf32> to vector<8x512xf32>
    %20 = arith.truncf %15 : vector<8x128xf32> to vector<8x128xbf16>
    %cst_19 = arith.constant dense<0.000000e+00> : vector<8x512xf32>
    %21 = tpu.matmul %20, %14, %cst_19 {dimension_numbers = #tpu.dot_dimension_numbers<[1], [0], [0], [1], [0, 0, 1, 1], [], []>} : vector<8x128xbf16>, vector<128x512xbf16>, vector<8x512xf32> -> vector<8x512xf32>
    %22 = arith.addf %19, %21 : vector<8x512xf32>
    %23 = vector.extract_strided_slice %22 {offsets = [0, 0], sizes = [8, 128], strides = [1, 1]} : vector<8x512xf32> to vector<8x128xf32>
    %cst_20 = arith.constant 5.000000e-01 : f32
    %24 = vector.broadcast %cst_20 : f32 to vector<8x128xf32>
    %25 = arith.mulf %24, %23 : vector<8x128xf32>
    %26 = math.tanh %25 : vector<8x128xf32>
    %cst_21 = arith.constant 5.000000e-01 : f32
    %27 = vector.broadcast %cst_21 : f32 to vector<8x128xf32>
    %28 = arith.mulf %27, %26 : vector<8x128xf32>
    %cst_22 = arith.constant 5.000000e-01 : f32
    %29 = vector.broadcast %cst_22 : f32 to vector<8x128xf32>
    %30 = arith.addf %28, %29 : vector<8x128xf32>
    %31 = vector.extract_strided_slice %22 {offsets = [0, 128], sizes = [8, 128], strides = [1, 1]} : vector<8x512xf32> to vector<8x128xf32>
    %cst_23 = arith.constant 5.000000e-01 : f32
    %32 = vector.broadcast %cst_23 : f32 to vector<8x128xf32>
    %33 = arith.mulf %32, %31 : vector<8x128xf32>
    %34 = math.tanh %33 : vector<8x128xf32>
    %cst_24 = arith.constant 5.000000e-01 : f32
    %35 = vector.broadcast %cst_24 : f32 to vector<8x128xf32>
    %36 = arith.mulf %35, %34 : vector<8x128xf32>
    %cst_25 = arith.constant 5.000000e-01 : f32
    %37 = vector.broadcast %cst_25 : f32 to vector<8x128xf32>
    %38 = arith.addf %36, %37 : vector<8x128xf32>
    %39 = vector.extract_strided_slice %22 {offsets = [0, 256], sizes = [8, 128], strides = [1, 1]} : vector<8x512xf32> to vector<8x128xf32>
    %40 = math.tanh %39 : vector<8x128xf32>
    %41 = vector.extract_strided_slice %22 {offsets = [0, 384], sizes = [8, 128], strides = [1, 1]} : vector<8x512xf32> to vector<8x128xf32>
    %cst_26 = arith.constant 5.000000e-01 : f32
    %42 = vector.broadcast %cst_26 : f32 to vector<8x128xf32>
    %43 = arith.mulf %42, %41 : vector<8x128xf32>
    %44 = math.tanh %43 : vector<8x128xf32>
    %cst_27 = arith.constant 5.000000e-01 : f32
    %45 = vector.broadcast %cst_27 : f32 to vector<8x128xf32>
    %46 = arith.mulf %45, %44 : vector<8x128xf32>
    %cst_28 = arith.constant 5.000000e-01 : f32
    %47 = vector.broadcast %cst_28 : f32 to vector<8x128xf32>
    %48 = arith.addf %46, %47 : vector<8x128xf32>
    %49 = arith.mulf %38, %16 : vector<8x128xf32>
    %50 = arith.mulf %30, %40 : vector<8x128xf32>
    %51 = arith.addf %49, %50 : vector<8x128xf32>
    %52 = math.tanh %51 : vector<8x128xf32>
    %53 = arith.mulf %48, %52 : vector<8x128xf32>
    %c1_i32 = arith.constant 1 : i32
    %54 = arith.index_cast %c1_i32 : i32 to index
    %c0_29 = arith.constant 0 : index
    %c0_30 = arith.constant 0 : index
    %55 = vector.load %arg11[%54, %c0_29, %c0_30] : memref<8x8x512xf32, #tpu.memory_space<vmem>>, vector<1x8x512xf32>
    %56 = vector.shape_cast %55 : vector<1x8x512xf32> to vector<8x512xf32>
    %57 = arith.truncf %53 : vector<8x128xf32> to vector<8x128xbf16>
    %cst_31 = arith.constant dense<0.000000e+00> : vector<8x512xf32>
    %58 = tpu.matmul %57, %14, %cst_31 {dimension_numbers = #tpu.dot_dimension_numbers<[1], [0], [0], [1], [0, 0, 1, 1], [], []>} : vector<8x128xbf16>, vector<128x512xbf16>, vector<8x512xf32> -> vector<8x512xf32>
    %59 = arith.addf %56, %58 : vector<8x512xf32>
    %60 = vector.extract_strided_slice %59 {offsets = [0, 0], sizes = [8, 128], strides = [1, 1]} : vector<8x512xf32> to vector<8x128xf32>
    %cst_32 = arith.constant 5.000000e-01 : f32
    %61 = vector.broadcast %cst_32 : f32 to vector<8x128xf32>
    %62 = arith.mulf %61, %60 : vector<8x128xf32>
    %63 = math.tanh %62 : vector<8x128xf32>
    %cst_33 = arith.constant 5.000000e-01 : f32
    %64 = vector.broadcast %cst_33 : f32 to vector<8x128xf32>
    %65 = arith.mulf %64, %63 : vector<8x128xf32>
    %cst_34 = arith.constant 5.000000e-01 : f32
    %66 = vector.broadcast %cst_34 : f32 to vector<8x128xf32>
    %67 = arith.addf %65, %66 : vector<8x128xf32>
    %68 = vector.extract_strided_slice %59 {offsets = [0, 128], sizes = [8, 128], strides = [1, 1]} : vector<8x512xf32> to vector<8x128xf32>
    %cst_35 = arith.constant 5.000000e-01 : f32
    %69 = vector.broadcast %cst_35 : f32 to vector<8x128xf32>
    %70 = arith.mulf %69, %68 : vector<8x128xf32>
    %71 = math.tanh %70 : vector<8x128xf32>
    %cst_36 = arith.constant 5.000000e-01 : f32
    %72 = vector.broadcast %cst_36 : f32 to vector<8x128xf32>
    %73 = arith.mulf %72, %71 : vector<8x128xf32>
    %cst_37 = arith.constant 5.000000e-01 : f32
    %74 = vector.broadcast %cst_37 : f32 to vector<8x128xf32>
    %75 = arith.addf %73, %74 : vector<8x128xf32>
    %76 = vector.extract_strided_slice %59 {offsets = [0, 256], sizes = [8, 128], strides = [1, 1]} : vector<8x512xf32> to vector<8x128xf32>
    %77 = math.tanh %76 : vector<8x128xf32>
    %78 = vector.extract_strided_slice %59 {offsets = [0, 384], sizes = [8, 128], strides = [1, 1]} : vector<8x512xf32> to vector<8x128xf32>
    %cst_38 = arith.constant 5.000000e-01 : f32
    %79 = vector.broadcast %cst_38 : f32 to vector<8x128xf32>
    %80 = arith.mulf %79, %78 : vector<8x128xf32>
    %81 = math.tanh %80 : vector<8x128xf32>
    %cst_39 = arith.constant 5.000000e-01 : f32
    %82 = vector.broadcast %cst_39 : f32 to vector<8x128xf32>
    %83 = arith.mulf %82, %81 : vector<8x128xf32>
    %cst_40 = arith.constant 5.000000e-01 : f32
    %84 = vector.broadcast %cst_40 : f32 to vector<8x128xf32>
    %85 = arith.addf %83, %84 : vector<8x128xf32>
    %86 = arith.mulf %75, %51 : vector<8x128xf32>
    %87 = arith.mulf %67, %77 : vector<8x128xf32>
    %88 = arith.addf %86, %87 : vector<8x128xf32>
    %89 = math.tanh %88 : vector<8x128xf32>
    %90 = arith.mulf %85, %89 : vector<8x128xf32>
    %c2_i32 = arith.constant 2 : i32
    %91 = arith.index_cast %c2_i32 : i32 to index
    %c0_41 = arith.constant 0 : index
    %c0_42 = arith.constant 0 : index
    %92 = vector.load %arg11[%91, %c0_41, %c0_42] : memref<8x8x512xf32, #tpu.memory_space<vmem>>, vector<1x8x512xf32>
    %93 = vector.shape_cast %92 : vector<1x8x512xf32> to vector<8x512xf32>
    %94 = arith.truncf %90 : vector<8x128xf32> to vector<8x128xbf16>
    %cst_43 = arith.constant dense<0.000000e+00> : vector<8x512xf32>
    %95 = tpu.matmul %94, %14, %cst_43 {dimension_numbers = #tpu.dot_dimension_numbers<[1], [0], [0], [1], [0, 0, 1, 1], [], []>} : vector<8x128xbf16>, vector<128x512xbf16>, vector<8x512xf32> -> vector<8x512xf32>
    %96 = arith.addf %93, %95 : vector<8x512xf32>
    %97 = vector.extract_strided_slice %96 {offsets = [0, 0], sizes = [8, 128], strides = [1, 1]} : vector<8x512xf32> to vector<8x128xf32>
    %cst_44 = arith.constant 5.000000e-01 : f32
    %98 = vector.broadcast %cst_44 : f32 to vector<8x128xf32>
    %99 = arith.mulf %98, %97 : vector<8x128xf32>
    %100 = math.tanh %99 : vector<8x128xf32>
    %cst_45 = arith.constant 5.000000e-01 : f32
    %101 = vector.broadcast %cst_45 : f32 to vector<8x128xf32>
    %102 = arith.mulf %101, %100 : vector<8x128xf32>
    %cst_46 = arith.constant 5.000000e-01 : f32
    %103 = vector.broadcast %cst_46 : f32 to vector<8x128xf32>
    %104 = arith.addf %102, %103 : vector<8x128xf32>
    %105 = vector.extract_strided_slice %96 {offsets = [0, 128], sizes = [8, 128], strides = [1, 1]} : vector<8x512xf32> to vector<8x128xf32>
    %cst_47 = arith.constant 5.000000e-01 : f32
    %106 = vector.broadcast %cst_47 : f32 to vector<8x128xf32>
    %107 = arith.mulf %106, %105 : vector<8x128xf32>
    %108 = math.tanh %107 : vector<8x128xf32>
    %cst_48 = arith.constant 5.000000e-01 : f32
    %109 = vector.broadcast %cst_48 : f32 to vector<8x128xf32>
    %110 = arith.mulf %109, %108 : vector<8x128xf32>
    %cst_49 = arith.constant 5.000000e-01 : f32
    %111 = vector.broadcast %cst_49 : f32 to vector<8x128xf32>
    %112 = arith.addf %110, %111 : vector<8x128xf32>
    %113 = vector.extract_strided_slice %96 {offsets = [0, 256], sizes = [8, 128], strides = [1, 1]} : vector<8x512xf32> to vector<8x128xf32>
    %114 = math.tanh %113 : vector<8x128xf32>
    %115 = vector.extract_strided_slice %96 {offsets = [0, 384], sizes = [8, 128], strides = [1, 1]} : vector<8x512xf32> to vector<8x128xf32>
    %cst_50 = arith.constant 5.000000e-01 : f32
    %116 = vector.broadcast %cst_50 : f32 to vector<8x128xf32>
    %117 = arith.mulf %116, %115 : vector<8x128xf32>
    %118 = math.tanh %117 : vector<8x128xf32>
    %cst_51 = arith.constant 5.000000e-01 : f32
    %119 = vector.broadcast %cst_51 : f32 to vector<8x128xf32>
    %120 = arith.mulf %119, %118 : vector<8x128xf32>
    %cst_52 = arith.constant 5.000000e-01 : f32
    %121 = vector.broadcast %cst_52 : f32 to vector<8x128xf32>
    %122 = arith.addf %120, %121 : vector<8x128xf32>
    %123 = arith.mulf %112, %88 : vector<8x128xf32>
    %124 = arith.mulf %104, %114 : vector<8x128xf32>
    %125 = arith.addf %123, %124 : vector<8x128xf32>
    %126 = math.tanh %125 : vector<8x128xf32>
    %127 = arith.mulf %122, %126 : vector<8x128xf32>
    %c3_i32 = arith.constant 3 : i32
    %128 = arith.index_cast %c3_i32 : i32 to index
    %c0_53 = arith.constant 0 : index
    %c0_54 = arith.constant 0 : index
    %129 = vector.load %arg11[%128, %c0_53, %c0_54] : memref<8x8x512xf32, #tpu.memory_space<vmem>>, vector<1x8x512xf32>
    %130 = vector.shape_cast %129 : vector<1x8x512xf32> to vector<8x512xf32>
    %131 = arith.truncf %127 : vector<8x128xf32> to vector<8x128xbf16>
    %cst_55 = arith.constant dense<0.000000e+00> : vector<8x512xf32>
    %132 = tpu.matmul %131, %14, %cst_55 {dimension_numbers = #tpu.dot_dimension_numbers<[1], [0], [0], [1], [0, 0, 1, 1], [], []>} : vector<8x128xbf16>, vector<128x512xbf16>, vector<8x512xf32> -> vector<8x512xf32>
    %133 = arith.addf %130, %132 : vector<8x512xf32>
    %134 = vector.extract_strided_slice %133 {offsets = [0, 0], sizes = [8, 128], strides = [1, 1]} : vector<8x512xf32> to vector<8x128xf32>
    %cst_56 = arith.constant 5.000000e-01 : f32
    %135 = vector.broadcast %cst_56 : f32 to vector<8x128xf32>
    %136 = arith.mulf %135, %134 : vector<8x128xf32>
    %137 = math.tanh %136 : vector<8x128xf32>
    %cst_57 = arith.constant 5.000000e-01 : f32
    %138 = vector.broadcast %cst_57 : f32 to vector<8x128xf32>
    %139 = arith.mulf %138, %137 : vector<8x128xf32>
    %cst_58 = arith.constant 5.000000e-01 : f32
    %140 = vector.broadcast %cst_58 : f32 to vector<8x128xf32>
    %141 = arith.addf %139, %140 : vector<8x128xf32>
    %142 = vector.extract_strided_slice %133 {offsets = [0, 128], sizes = [8, 128], strides = [1, 1]} : vector<8x512xf32> to vector<8x128xf32>
    %cst_59 = arith.constant 5.000000e-01 : f32
    %143 = vector.broadcast %cst_59 : f32 to vector<8x128xf32>
    %144 = arith.mulf %143, %142 : vector<8x128xf32>
    %145 = math.tanh %144 : vector<8x128xf32>
    %cst_60 = arith.constant 5.000000e-01 : f32
    %146 = vector.broadcast %cst_60 : f32 to vector<8x128xf32>
    %147 = arith.mulf %146, %145 : vector<8x128xf32>
    %cst_61 = arith.constant 5.000000e-01 : f32
    %148 = vector.broadcast %cst_61 : f32 to vector<8x128xf32>
    %149 = arith.addf %147, %148 : vector<8x128xf32>
    %150 = vector.extract_strided_slice %133 {offsets = [0, 256], sizes = [8, 128], strides = [1, 1]} : vector<8x512xf32> to vector<8x128xf32>
    %151 = math.tanh %150 : vector<8x128xf32>
    %152 = vector.extract_strided_slice %133 {offsets = [0, 384], sizes = [8, 128], strides = [1, 1]} : vector<8x512xf32> to vector<8x128xf32>
    %cst_62 = arith.constant 5.000000e-01 : f32
    %153 = vector.broadcast %cst_62 : f32 to vector<8x128xf32>
    %154 = arith.mulf %153, %152 : vector<8x128xf32>
    %155 = math.tanh %154 : vector<8x128xf32>
    %cst_63 = arith.constant 5.000000e-01 : f32
    %156 = vector.broadcast %cst_63 : f32 to vector<8x128xf32>
    %157 = arith.mulf %156, %155 : vector<8x128xf32>
    %cst_64 = arith.constant 5.000000e-01 : f32
    %158 = vector.broadcast %cst_64 : f32 to vector<8x128xf32>
    %159 = arith.addf %157, %158 : vector<8x128xf32>
    %160 = arith.mulf %149, %125 : vector<8x128xf32>
    %161 = arith.mulf %141, %151 : vector<8x128xf32>
    %162 = arith.addf %160, %161 : vector<8x128xf32>
    %163 = math.tanh %162 : vector<8x128xf32>
    %164 = arith.mulf %159, %163 : vector<8x128xf32>
    %c4_i32 = arith.constant 4 : i32
    %165 = arith.index_cast %c4_i32 : i32 to index
    %c0_65 = arith.constant 0 : index
    %c0_66 = arith.constant 0 : index
    %166 = vector.load %arg11[%165, %c0_65, %c0_66] : memref<8x8x512xf32, #tpu.memory_space<vmem>>, vector<1x8x512xf32>
    %167 = vector.shape_cast %166 : vector<1x8x512xf32> to vector<8x512xf32>
    %168 = arith.truncf %164 : vector<8x128xf32> to vector<8x128xbf16>
    %cst_67 = arith.constant dense<0.000000e+00> : vector<8x512xf32>
    %169 = tpu.matmul %168, %14, %cst_67 {dimension_numbers = #tpu.dot_dimension_numbers<[1], [0], [0], [1], [0, 0, 1, 1], [], []>} : vector<8x128xbf16>, vector<128x512xbf16>, vector<8x512xf32> -> vector<8x512xf32>
    %170 = arith.addf %167, %169 : vector<8x512xf32>
    %171 = vector.extract_strided_slice %170 {offsets = [0, 0], sizes = [8, 128], strides = [1, 1]} : vector<8x512xf32> to vector<8x128xf32>
    %cst_68 = arith.constant 5.000000e-01 : f32
    %172 = vector.broadcast %cst_68 : f32 to vector<8x128xf32>
    %173 = arith.mulf %172, %171 : vector<8x128xf32>
    %174 = math.tanh %173 : vector<8x128xf32>
    %cst_69 = arith.constant 5.000000e-01 : f32
    %175 = vector.broadcast %cst_69 : f32 to vector<8x128xf32>
    %176 = arith.mulf %175, %174 : vector<8x128xf32>
    %cst_70 = arith.constant 5.000000e-01 : f32
    %177 = vector.broadcast %cst_70 : f32 to vector<8x128xf32>
    %178 = arith.addf %176, %177 : vector<8x128xf32>
    %179 = vector.extract_strided_slice %170 {offsets = [0, 128], sizes = [8, 128], strides = [1, 1]} : vector<8x512xf32> to vector<8x128xf32>
    %cst_71 = arith.constant 5.000000e-01 : f32
    %180 = vector.broadcast %cst_71 : f32 to vector<8x128xf32>
    %181 = arith.mulf %180, %179 : vector<8x128xf32>
    %182 = math.tanh %181 : vector<8x128xf32>
    %cst_72 = arith.constant 5.000000e-01 : f32
    %183 = vector.broadcast %cst_72 : f32 to vector<8x128xf32>
    %184 = arith.mulf %183, %182 : vector<8x128xf32>
    %cst_73 = arith.constant 5.000000e-01 : f32
    %185 = vector.broadcast %cst_73 : f32 to vector<8x128xf32>
    %186 = arith.addf %184, %185 : vector<8x128xf32>
    %187 = vector.extract_strided_slice %170 {offsets = [0, 256], sizes = [8, 128], strides = [1, 1]} : vector<8x512xf32> to vector<8x128xf32>
    %188 = math.tanh %187 : vector<8x128xf32>
    %189 = vector.extract_strided_slice %170 {offsets = [0, 384], sizes = [8, 128], strides = [1, 1]} : vector<8x512xf32> to vector<8x128xf32>
    %cst_74 = arith.constant 5.000000e-01 : f32
    %190 = vector.broadcast %cst_74 : f32 to vector<8x128xf32>
    %191 = arith.mulf %190, %189 : vector<8x128xf32>
    %192 = math.tanh %191 : vector<8x128xf32>
    %cst_75 = arith.constant 5.000000e-01 : f32
    %193 = vector.broadcast %cst_75 : f32 to vector<8x128xf32>
    %194 = arith.mulf %193, %192 : vector<8x128xf32>
    %cst_76 = arith.constant 5.000000e-01 : f32
    %195 = vector.broadcast %cst_76 : f32 to vector<8x128xf32>
    %196 = arith.addf %194, %195 : vector<8x128xf32>
    %197 = arith.mulf %186, %162 : vector<8x128xf32>
    %198 = arith.mulf %178, %188 : vector<8x128xf32>
    %199 = arith.addf %197, %198 : vector<8x128xf32>
    %200 = math.tanh %199 : vector<8x128xf32>
    %201 = arith.mulf %196, %200 : vector<8x128xf32>
    %c5_i32 = arith.constant 5 : i32
    %202 = arith.index_cast %c5_i32 : i32 to index
    %c0_77 = arith.constant 0 : index
    %c0_78 = arith.constant 0 : index
    %203 = vector.load %arg11[%202, %c0_77, %c0_78] : memref<8x8x512xf32, #tpu.memory_space<vmem>>, vector<1x8x512xf32>
    %204 = vector.shape_cast %203 : vector<1x8x512xf32> to vector<8x512xf32>
    %205 = arith.truncf %201 : vector<8x128xf32> to vector<8x128xbf16>
    %cst_79 = arith.constant dense<0.000000e+00> : vector<8x512xf32>
    %206 = tpu.matmul %205, %14, %cst_79 {dimension_numbers = #tpu.dot_dimension_numbers<[1], [0], [0], [1], [0, 0, 1, 1], [], []>} : vector<8x128xbf16>, vector<128x512xbf16>, vector<8x512xf32> -> vector<8x512xf32>
    %207 = arith.addf %204, %206 : vector<8x512xf32>
    %208 = vector.extract_strided_slice %207 {offsets = [0, 0], sizes = [8, 128], strides = [1, 1]} : vector<8x512xf32> to vector<8x128xf32>
    %cst_80 = arith.constant 5.000000e-01 : f32
    %209 = vector.broadcast %cst_80 : f32 to vector<8x128xf32>
    %210 = arith.mulf %209, %208 : vector<8x128xf32>
    %211 = math.tanh %210 : vector<8x128xf32>
    %cst_81 = arith.constant 5.000000e-01 : f32
    %212 = vector.broadcast %cst_81 : f32 to vector<8x128xf32>
    %213 = arith.mulf %212, %211 : vector<8x128xf32>
    %cst_82 = arith.constant 5.000000e-01 : f32
    %214 = vector.broadcast %cst_82 : f32 to vector<8x128xf32>
    %215 = arith.addf %213, %214 : vector<8x128xf32>
    %216 = vector.extract_strided_slice %207 {offsets = [0, 128], sizes = [8, 128], strides = [1, 1]} : vector<8x512xf32> to vector<8x128xf32>
    %cst_83 = arith.constant 5.000000e-01 : f32
    %217 = vector.broadcast %cst_83 : f32 to vector<8x128xf32>
    %218 = arith.mulf %217, %216 : vector<8x128xf32>
    %219 = math.tanh %218 : vector<8x128xf32>
    %cst_84 = arith.constant 5.000000e-01 : f32
    %220 = vector.broadcast %cst_84 : f32 to vector<8x128xf32>
    %221 = arith.mulf %220, %219 : vector<8x128xf32>
    %cst_85 = arith.constant 5.000000e-01 : f32
    %222 = vector.broadcast %cst_85 : f32 to vector<8x128xf32>
    %223 = arith.addf %221, %222 : vector<8x128xf32>
    %224 = vector.extract_strided_slice %207 {offsets = [0, 256], sizes = [8, 128], strides = [1, 1]} : vector<8x512xf32> to vector<8x128xf32>
    %225 = math.tanh %224 : vector<8x128xf32>
    %226 = vector.extract_strided_slice %207 {offsets = [0, 384], sizes = [8, 128], strides = [1, 1]} : vector<8x512xf32> to vector<8x128xf32>
    %cst_86 = arith.constant 5.000000e-01 : f32
    %227 = vector.broadcast %cst_86 : f32 to vector<8x128xf32>
    %228 = arith.mulf %227, %226 : vector<8x128xf32>
    %229 = math.tanh %228 : vector<8x128xf32>
    %cst_87 = arith.constant 5.000000e-01 : f32
    %230 = vector.broadcast %cst_87 : f32 to vector<8x128xf32>
    %231 = arith.mulf %230, %229 : vector<8x128xf32>
    %cst_88 = arith.constant 5.000000e-01 : f32
    %232 = vector.broadcast %cst_88 : f32 to vector<8x128xf32>
    %233 = arith.addf %231, %232 : vector<8x128xf32>
    %234 = arith.mulf %223, %199 : vector<8x128xf32>
    %235 = arith.mulf %215, %225 : vector<8x128xf32>
    %236 = arith.addf %234, %235 : vector<8x128xf32>
    %237 = math.tanh %236 : vector<8x128xf32>
    %238 = arith.mulf %233, %237 : vector<8x128xf32>
    %c6_i32 = arith.constant 6 : i32
    %239 = arith.index_cast %c6_i32 : i32 to index
    %c0_89 = arith.constant 0 : index
    %c0_90 = arith.constant 0 : index
    %240 = vector.load %arg11[%239, %c0_89, %c0_90] : memref<8x8x512xf32, #tpu.memory_space<vmem>>, vector<1x8x512xf32>
    %241 = vector.shape_cast %240 : vector<1x8x512xf32> to vector<8x512xf32>
    %242 = arith.truncf %238 : vector<8x128xf32> to vector<8x128xbf16>
    %cst_91 = arith.constant dense<0.000000e+00> : vector<8x512xf32>
    %243 = tpu.matmul %242, %14, %cst_91 {dimension_numbers = #tpu.dot_dimension_numbers<[1], [0], [0], [1], [0, 0, 1, 1], [], []>} : vector<8x128xbf16>, vector<128x512xbf16>, vector<8x512xf32> -> vector<8x512xf32>
    %244 = arith.addf %241, %243 : vector<8x512xf32>
    %245 = vector.extract_strided_slice %244 {offsets = [0, 0], sizes = [8, 128], strides = [1, 1]} : vector<8x512xf32> to vector<8x128xf32>
    %cst_92 = arith.constant 5.000000e-01 : f32
    %246 = vector.broadcast %cst_92 : f32 to vector<8x128xf32>
    %247 = arith.mulf %246, %245 : vector<8x128xf32>
    %248 = math.tanh %247 : vector<8x128xf32>
    %cst_93 = arith.constant 5.000000e-01 : f32
    %249 = vector.broadcast %cst_93 : f32 to vector<8x128xf32>
    %250 = arith.mulf %249, %248 : vector<8x128xf32>
    %cst_94 = arith.constant 5.000000e-01 : f32
    %251 = vector.broadcast %cst_94 : f32 to vector<8x128xf32>
    %252 = arith.addf %250, %251 : vector<8x128xf32>
    %253 = vector.extract_strided_slice %244 {offsets = [0, 128], sizes = [8, 128], strides = [1, 1]} : vector<8x512xf32> to vector<8x128xf32>
    %cst_95 = arith.constant 5.000000e-01 : f32
    %254 = vector.broadcast %cst_95 : f32 to vector<8x128xf32>
    %255 = arith.mulf %254, %253 : vector<8x128xf32>
    %256 = math.tanh %255 : vector<8x128xf32>
    %cst_96 = arith.constant 5.000000e-01 : f32
    %257 = vector.broadcast %cst_96 : f32 to vector<8x128xf32>
    %258 = arith.mulf %257, %256 : vector<8x128xf32>
    %cst_97 = arith.constant 5.000000e-01 : f32
    %259 = vector.broadcast %cst_97 : f32 to vector<8x128xf32>
    %260 = arith.addf %258, %259 : vector<8x128xf32>
    %261 = vector.extract_strided_slice %244 {offsets = [0, 256], sizes = [8, 128], strides = [1, 1]} : vector<8x512xf32> to vector<8x128xf32>
    %262 = math.tanh %261 : vector<8x128xf32>
    %263 = vector.extract_strided_slice %244 {offsets = [0, 384], sizes = [8, 128], strides = [1, 1]} : vector<8x512xf32> to vector<8x128xf32>
    %cst_98 = arith.constant 5.000000e-01 : f32
    %264 = vector.broadcast %cst_98 : f32 to vector<8x128xf32>
    %265 = arith.mulf %264, %263 : vector<8x128xf32>
    %266 = math.tanh %265 : vector<8x128xf32>
    %cst_99 = arith.constant 5.000000e-01 : f32
    %267 = vector.broadcast %cst_99 : f32 to vector<8x128xf32>
    %268 = arith.mulf %267, %266 : vector<8x128xf32>
    %cst_100 = arith.constant 5.000000e-01 : f32
    %269 = vector.broadcast %cst_100 : f32 to vector<8x128xf32>
    %270 = arith.addf %268, %269 : vector<8x128xf32>
    %271 = arith.mulf %260, %236 : vector<8x128xf32>
    %272 = arith.mulf %252, %262 : vector<8x128xf32>
    %273 = arith.addf %271, %272 : vector<8x128xf32>
    %274 = math.tanh %273 : vector<8x128xf32>
    %275 = arith.mulf %270, %274 : vector<8x128xf32>
    %c7_i32 = arith.constant 7 : i32
    %276 = arith.index_cast %c7_i32 : i32 to index
    %c0_101 = arith.constant 0 : index
    %c0_102 = arith.constant 0 : index
    %277 = vector.load %arg11[%276, %c0_101, %c0_102] : memref<8x8x512xf32, #tpu.memory_space<vmem>>, vector<1x8x512xf32>
    %278 = vector.shape_cast %277 : vector<1x8x512xf32> to vector<8x512xf32>
    %279 = arith.truncf %275 : vector<8x128xf32> to vector<8x128xbf16>
    %cst_103 = arith.constant dense<0.000000e+00> : vector<8x512xf32>
    %280 = tpu.matmul %279, %14, %cst_103 {dimension_numbers = #tpu.dot_dimension_numbers<[1], [0], [0], [1], [0, 0, 1, 1], [], []>} : vector<8x128xbf16>, vector<128x512xbf16>, vector<8x512xf32> -> vector<8x512xf32>
    %281 = arith.addf %278, %280 : vector<8x512xf32>
    %282 = vector.extract_strided_slice %281 {offsets = [0, 0], sizes = [8, 128], strides = [1, 1]} : vector<8x512xf32> to vector<8x128xf32>
    %cst_104 = arith.constant 5.000000e-01 : f32
    %283 = vector.broadcast %cst_104 : f32 to vector<8x128xf32>
    %284 = arith.mulf %283, %282 : vector<8x128xf32>
    %285 = math.tanh %284 : vector<8x128xf32>
    %cst_105 = arith.constant 5.000000e-01 : f32
    %286 = vector.broadcast %cst_105 : f32 to vector<8x128xf32>
    %287 = arith.mulf %286, %285 : vector<8x128xf32>
    %cst_106 = arith.constant 5.000000e-01 : f32
    %288 = vector.broadcast %cst_106 : f32 to vector<8x128xf32>
    %289 = arith.addf %287, %288 : vector<8x128xf32>
    %290 = vector.extract_strided_slice %281 {offsets = [0, 128], sizes = [8, 128], strides = [1, 1]} : vector<8x512xf32> to vector<8x128xf32>
    %cst_107 = arith.constant 5.000000e-01 : f32
    %291 = vector.broadcast %cst_107 : f32 to vector<8x128xf32>
    %292 = arith.mulf %291, %290 : vector<8x128xf32>
    %293 = math.tanh %292 : vector<8x128xf32>
    %cst_108 = arith.constant 5.000000e-01 : f32
    %294 = vector.broadcast %cst_108 : f32 to vector<8x128xf32>
    %295 = arith.mulf %294, %293 : vector<8x128xf32>
    %cst_109 = arith.constant 5.000000e-01 : f32
    %296 = vector.broadcast %cst_109 : f32 to vector<8x128xf32>
    %297 = arith.addf %295, %296 : vector<8x128xf32>
    %298 = vector.extract_strided_slice %281 {offsets = [0, 256], sizes = [8, 128], strides = [1, 1]} : vector<8x512xf32> to vector<8x128xf32>
    %299 = math.tanh %298 : vector<8x128xf32>
    %300 = vector.extract_strided_slice %281 {offsets = [0, 384], sizes = [8, 128], strides = [1, 1]} : vector<8x512xf32> to vector<8x128xf32>
    %cst_110 = arith.constant 5.000000e-01 : f32
    %301 = vector.broadcast %cst_110 : f32 to vector<8x128xf32>
    %302 = arith.mulf %301, %300 : vector<8x128xf32>
    %303 = math.tanh %302 : vector<8x128xf32>
    %cst_111 = arith.constant 5.000000e-01 : f32
    %304 = vector.broadcast %cst_111 : f32 to vector<8x128xf32>
    %305 = arith.mulf %304, %303 : vector<8x128xf32>
    %cst_112 = arith.constant 5.000000e-01 : f32
    %306 = vector.broadcast %cst_112 : f32 to vector<8x128xf32>
    %307 = arith.addf %305, %306 : vector<8x128xf32>
    %308 = arith.mulf %297, %273 : vector<8x128xf32>
    %309 = arith.mulf %289, %299 : vector<8x128xf32>
    %310 = arith.addf %308, %309 : vector<8x128xf32>
    %311 = math.tanh %310 : vector<8x128xf32>
    %312 = arith.mulf %307, %311 : vector<8x128xf32>
    %c8_i32 = arith.constant 8 : i32
    %c0_113 = arith.constant 0 : index
    %c0_114 = arith.constant 0 : index
    %313 = vector.load %arg9[%c0_113, %c0_114] : memref<8x128xf32, #tpu.memory_space<vmem>>, vector<8x128xf32>
    tpu.vector_store %arg9[%c0_113, %c0_114], %312 {strides = array<i32>} : memref<8x128xf32, #tpu.memory_space<vmem>>, vector<8x128xf32>,
    %c0_115 = arith.constant 0 : index
    %c0_116 = arith.constant 0 : index
    %314 = vector.load %arg10[%c0_115, %c0_116] : memref<8x128xf32, #tpu.memory_space<vmem>>, vector<8x128xf32>
    tpu.vector_store %arg10[%c0_115, %c0_116], %310 {strides = array<i32>} : memref<8x128xf32, #tpu.memory_space<vmem>>, vector<8x128xf32>,
    %c0_i32_117 = arith.constant 0 : i32
    %315 = arith.cmpi eq, %arg1, %c0_i32_117 : i32
    %316 = arith.extui %315 : i1 to i32
    %c0_i32_118 = arith.constant 0 : i32
    %317 = arith.cmpi ne, %316, %c0_i32_118 : i32
    scf.if %317 {
      %318 = arith.truncf %312 : vector<8x128xf32> to vector<8x128xbf16>
      %c0_119 = arith.constant 0 : index
      %c0_120 = arith.constant 0 : index
      %319 = vector.load %arg6[%c0_119, %c0_120] : memref<128x128xbf16, #tpu.memory_space<vmem>>, vector<128x128xbf16>
      %cst_121 = arith.constant dense<0.000000e+00> : vector<8x128xf32>
      %320 = tpu.matmul %318, %319, %cst_121 {dimension_numbers = #tpu.dot_dimension_numbers<[1], [0], [0], [1], [0, 0, 1, 1], [], []>} : vector<8x128xbf16>, vector<128x128xbf16>, vector<8x128xf32> -> vector<8x128xf32>
      %c0_122 = arith.constant 0 : index
      %c0_123 = arith.constant 0 : index
      %321 = vector.load %arg7[%c0_122, %c0_123] : memref<1x128xf32, #tpu.memory_space<vmem>>, vector<1x128xf32>
      %322 = vector.broadcast %321 : vector<1x128xf32> to vector<8x128xf32>
      %323 = arith.addf %320, %322 : vector<8x128xf32>
      %cst_124 = arith.constant 5.000000e-01 : f32
      %324 = vector.broadcast %cst_124 : f32 to vector<8x128xf32>
      %325 = arith.mulf %324, %323 : vector<8x128xf32>
      %326 = math.tanh %325 : vector<8x128xf32>
      %cst_125 = arith.constant 5.000000e-01 : f32
      %327 = vector.broadcast %cst_125 : f32 to vector<8x128xf32>
      %328 = arith.mulf %327, %326 : vector<8x128xf32>
      %cst_126 = arith.constant 5.000000e-01 : f32
      %329 = vector.broadcast %cst_126 : f32 to vector<8x128xf32>
      %330 = arith.addf %328, %329 : vector<8x128xf32>
      %c0_127 = arith.constant 0 : index
      %c0_128 = arith.constant 0 : index
      %331 = vector.load %arg8[%c0_127, %c0_128] : memref<8x128xf32, #tpu.memory_space<vmem>>, vector<8x128xf32>
      tpu.vector_store %arg8[%c0_127, %c0_128], %330 {strides = array<i32>} : memref<8x128xf32, #tpu.memory_space<vmem>>, vector<8x128xf32>,
    } else {
    }
    return
  }
  func.func @transform_0(%arg0: i32, %arg1: i32) -> (i32, i32, i32) {
    %c0_i32 = arith.constant 0 : i32
    %c0_i32_0 = arith.constant 0 : i32
    return %arg1, %arg0, %c0_i32 : i32, i32, i32
  }
  func.func @transform_1(%arg0: i32, %arg1: i32) -> (i32, i32) {
    %c0_i32 = arith.constant 0 : i32
    %c0_i32_0 = arith.constant 0 : i32
    %c0_i32_1 = arith.constant 0 : i32
    return %c0_i32, %c0_i32_0 : i32, i32
  }
  func.func @transform_2(%arg0: i32, %arg1: i32) -> (i32, i32) {
    %c0_i32 = arith.constant 0 : i32
    %c0_i32_0 = arith.constant 0 : i32
    %c0_i32_1 = arith.constant 0 : i32
    return %c0_i32, %c0_i32_0 : i32, i32
  }
  func.func @transform_3(%arg0: i32, %arg1: i32) -> (i32, i32) {
    %c0_i32 = arith.constant 0 : i32
    %c0_i32_0 = arith.constant 0 : i32
    %c0_i32_1 = arith.constant 0 : i32
    return %c0_i32, %c0_i32_0 : i32, i32
  }
  func.func @transform_4(%arg0: i32, %arg1: i32) -> (i32, i32) {
    %c0_i32 = arith.constant 0 : i32
    %c0_i32_0 = arith.constant 0 : i32
    %c0_i32_1 = arith.constant 0 : i32
    return %c0_i32, %c0_i32_0 : i32, i32
  }
  func.func @transform_5(%arg0: i32, %arg1: i32) -> (i32, i32) {
    %c0_i32 = arith.constant 0 : i32
    %c0_i32_0 = arith.constant 0 : i32
    %c0_i32_1 = arith.constant 0 : i32
    return %c0_i32, %c0_i32_0 : i32, i32
  }
  func.func @transform_6(%arg0: i32, %arg1: i32) -> (i32, i32) {
    %c0_i32 = arith.constant 0 : i32
    %c0_i32_0 = arith.constant 0 : i32
    return %arg0, %c0_i32 : i32, i32
  }
}

</mosaic_0001>

<llo_original>
// kernel: tpu_custom_call.1
$region0: #{tpu_custom_call.1}
  #allocation0 [shape = 'u32[]', space=smem, size = 0x4, offset = 0x4, fixed_abs, tag = 'smem constant byte address 0x4 - core index']
  #allocation1 [shape = 'u32[72,128]{1,0:T(1,128)}', space=vmem, size = 0x9000, scoped, tag = 'internal scratch']
  #allocation2 [shape = 'f32[8,128]{1,0:T(8,128)}', space=vmem, size = 0x1000, scoped, tag = 'scratch operand']
  #allocation3 [shape = 'f32[8,128]{1,0:T(8,128)}', space=vmem, size = 0x1000, scoped, tag = 'scratch operand']
  #allocation4 [shape = 'f32[8,8,512]{2,1,0:T(8,128)}', space=vmem, size = 0x20000, scoped, tag = 'scratch operand']
  %s0 = inlined_call_operand.hbm [shape: f32[8,8,32], index: 0, kind: input, shape index: {}]
  %s1 = inlined_call_operand.hbm [shape: bf16[32,512], index: 1, kind: input, shape index: {}]
  %s2 = inlined_call_operand.hbm [shape: bf16[128,512], index: 2, kind: input, shape index: {}]
  %s3 = inlined_call_operand.hbm [shape: f32[8,512], index: 3, kind: input, shape index: {}]
  %s4 = inlined_call_operand.hbm [shape: bf16[128,128], index: 4, kind: input, shape index: {}]
  %s5 = inlined_call_operand.vmem [shape: f32[1,128], index: 5, kind: input, shape index: {}]
  %s6 = inlined_call_operand.hbm [shape: f32[8,128], index: 6, kind: output, shape index: {}]
  %s7 = sld [smem:[#allocation0]]
  $region62: #{tpu_custom_call.1} parent=0
    _
  %s9 = ssub.s32 1, %s7
  %s10 = scalar_select 0, %s9, %s7
  $region1: #{tpu_custom_call.1} parent=0
    #allocation5 [shape = 'u8[32768]{0}', space=vmem, size = 0x8000, scoped, tag = 'input window, operand 0, single buffered']
    #allocation6 [shape = 's32[1]{0}', space=sflag, size = 0x4, scoped, tag = 'scoped memory for tpu_custom_call.1']
    #allocation7 [shape = 's32[1]{0}', space=sflag, size = 0x4, scoped, tag = 'scoped memory for tpu_custom_call.1']
    #allocation8 [shape = 'u8[32768]{0}', space=vmem, size = 0x8000, scoped, tag = 'input window, operand 1, single buffered']
    #allocation9 [shape = 's32[1]{0}', space=sflag, size = 0x4, scoped, tag = 'scoped memory for tpu_custom_call.1']
    #allocation10 [shape = 'u8[131072]{0}', space=vmem, size = 0x20000, scoped, tag = 'input window, operand 2, single buffered']
    #allocation11 [shape = 'u8[16384]{0}', space=vmem, size = 0x4000, scoped, tag = 'input window, operand 3, single buffered']
    #allocation12 [shape = 's32[1]{0}', space=sflag, size = 0x4, scoped, tag = 'scoped memory for tpu_custom_call.1']
    #allocation13 [shape = 'u8[32768]{0}', space=vmem, size = 0x8000, scoped, tag = 'input window, operand 4, single buffered']
    #allocation14 [shape = 'u8[4096]{0}', space=vmem, size = 0x1000, scoped, tag = 'output window, operand 0, single buffered']
    %11 = vsyncpa [#allocation6], 0
    %12 = vsyncpa [#allocation9], 0
    %13 = vsyncpa [#allocation12], 0
    %14 = vsyncpa [#allocation7], 0
    // Predicated region
    $region2: #{tpu_custom_call.1} parent=1 // pred_check
      _
    $region3: #{tpu_custom_call.1} parent=1 // pred_check_branch
      %16 = sbr.rel (0) target = $region5
    $region4: #{tpu_custom_call.1} parent=1 // pred_region
      %18 = vsyncadd [#allocation6], 0
      %s19 = sshll.u32 %s0, 4
      %s20 = int_to_ptr.hbm [resolvable:$true] %s19
      %s21 = sshll.u32 [#allocation5], 4
      %s22 = int_to_ptr.vmem [resolvable:$true] %s21
      %27 = dma.hbm_to_vmem [thread:$0]  %s20, 1024, %s22, [#allocation6], 128, 128, 8
    $region5: #{tpu_custom_call.1} parent=1 // pred_fallthru
      _
    // Predicated region
    $region6: #{tpu_custom_call.1} parent=1 // pred_check
      _
    $region7: #{tpu_custom_call.1} parent=1 // pred_check_branch
      %29 = sbr.rel (0) target = $region9
    $region8: #{tpu_custom_call.1} parent=1 // pred_region
      %31 = vsyncadd [#allocation9], 0
      %s32 = sshll.u32 %s1, 4
      %s33 = int_to_ptr.hbm [resolvable:$true] %s32
      %s34 = sshll.u32 [#allocation8], 4
      %s35 = int_to_ptr.vmem [resolvable:$true] %s34
      %40 = dma.hbm_to_vmem [thread:$0]  %s33, 1024, %s35, [#allocation9], 256, 256, 16
    $region9: #{tpu_custom_call.1} parent=1 // pred_fallthru
      _
    // Predicated region
    $region10: #{tpu_custom_call.1} parent=1 // pred_check
      _
    $region11: #{tpu_custom_call.1} parent=1 // pred_check_branch
      %42 = sbr.rel (0) target = $region13
    $region12: #{tpu_custom_call.1} parent=1 // pred_region
      %44 = vsyncadd [#allocation9], 0
      %s45 = sshll.u32 %s2, 4
      %s46 = int_to_ptr.hbm [resolvable:$true] %s45
      %s47 = sshll.u32 [#allocation10], 4
      %s48 = int_to_ptr.vmem [resolvable:$true] %s47
      %53 = dma.hbm_to_vmem [thread:$0]  %s46, 4096, %s48, [#allocation9], 256, 256, 16
    $region13: #{tpu_custom_call.1} parent=1 // pred_fallthru
      _
    // Predicated region
    $region14: #{tpu_custom_call.1} parent=1 // pred_check
      _
    $region15: #{tpu_custom_call.1} parent=1 // pred_check_branch
      %55 = sbr.rel (0) target = $region17
    $region16: #{tpu_custom_call.1} parent=1 // pred_region
      %57 = vsyncadd [#allocation12], 0
      %s59 = sshll.u32 %s3, 4
      %s60 = int_to_ptr.hbm [resolvable:$true] %s59
      %s61 = sshll.u32 [#allocation11], 4
      %s62 = int_to_ptr.vmem [resolvable:$true] %s61
      %64 = dma.hbm_to_vmem [thread:$0]  %s60, 512, %s62, [#allocation12]
    $region17: #{tpu_custom_call.1} parent=1 // pred_fallthru
      _
    // Predicated region
    $region18: #{tpu_custom_call.1} parent=1 // pred_check
      _
    $region19: #{tpu_custom_call.1} parent=1 // pred_check_branch
      %66 = sbr.rel (0) target = $region21
    $region20: #{tpu_custom_call.1} parent=1 // pred_region
      %68 = vsyncadd [#allocation12], 0
      %s69 = sshll.u32 %s4, 4
      %s70 = int_to_ptr.hbm [resolvable:$true] %s69
      %s71 = sshll.u32 [#allocation13], 4
      %s72 = int_to_ptr.vmem [resolvable:$true] %s71
      %77 = dma.hbm_to_vmem [thread:$0]  %s70, 1024, %s72, [#allocation12], 64, 64, 4
    $region21: #{tpu_custom_call.1} parent=1 // pred_fallthru
      _
    // Predicated region
    $region22: #{tpu_custom_call.1} parent=1 // pred_check
      _
    $region23: #{tpu_custom_call.1} parent=1 // pred_check_branch
      %79 = sbr.rel (0) target = $region25
    $region24: #{tpu_custom_call.1} parent=1 // pred_region
      _
    $region25: #{tpu_custom_call.1} parent=1 // pred_fallthru
      _
    // Predicated region
    $region26: #{tpu_custom_call.1} parent=1 // pred_check
      _
    $region27: #{tpu_custom_call.1} parent=1 // pred_check_branch
      %81 = sbr.rel (0) target = $region29
    $region28: #{tpu_custom_call.1} parent=1 // pred_region
      %83 = dma.done [#allocation6], 1024
    $region29: #{tpu_custom_call.1} parent=1 // pred_fallthru
      _
    // Predicated region
    $region30: #{tpu_custom_call.1} parent=1 // pred_check
      _
    $region31: #{tpu_custom_call.1} parent=1 // pred_check_branch
      %85 = sbr.rel (0) target = $region33
    $region32: #{tpu_custom_call.1} parent=1 // pred_region
      %87 = dma.done [#allocation9], 1024
    $region33: #{tpu_custom_call.1} parent=1 // pred_fallthru
      _
    // Predicated region
    $region34: #{tpu_custom_call.1} parent=1 // pred_check
      _
    $region35: #{tpu_custom_call.1} parent=1 // pred_check_branch
      %89 = sbr.rel (0) target = $region37
    $region36: #{tpu_custom_call.1} parent=1 // pred_region
      %91 = dma.done [#allocation9], 4096
    $region37: #{tpu_custom_call.1} parent=1 // pred_fallthru
      _
    // Predicated region
    $region38: #{tpu_custom_call.1} parent=1 // pred_check
      _
    $region39: #{tpu_custom_call.1} parent=1 // pred_check_branch
      %93 = sbr.rel (0) target = $region41
    $region40: #{tpu_custom_call.1} parent=1 // pred_region
      %95 = dma.done [#allocation12], 512
    $region41: #{tpu_custom_call.1} parent=1 // pred_fallthru
      _
    // Predicated region
    $region42: #{tpu_custom_call.1} parent=1 // pred_check
      _
    $region43: #{tpu_custom_call.1} parent=1 // pred_check_branch
      %97 = sbr.rel (0) target = $region45
    $region44: #{tpu_custom_call.1} parent=1 // pred_region
      %99 = dma.done [#allocation12], 1024
    $region45: #{tpu_custom_call.1} parent=1 // pred_fallthru
      _
    %p101 = scmp.eq.s32.totalorder 0, 0
    // Predicated region
    $region46: #{tpu_custom_call.1} parent=1 // pred_check
      %p102 = pneg %p101
    $region47: #{tpu_custom_call.1} parent=1 // pred_check_branch
      %104 = sbr.rel (%p102) target = $region49
    $region48: #{tpu_custom_call.1} parent=1 // pred_region
      %105 = vst [vmem:[#allocation2] sm:$0xff] 0.0
      %106 = vst [vmem:[#allocation3] sm:$0xff] 0.0
    $region49: #{tpu_custom_call.1} parent=1 // pred_fallthru
      _
    %v107 = vld [vmem:[#allocation5] sm:$0xff]
    %v108 = vld [vmem:[#allocation5 + $0x8] sm:$0xff]
    %v109 = vld [vmem:[#allocation5 + $0x10] sm:$0xff]
    %v110 = vld [vmem:[#allocation5 + $0x18] sm:$0xff]
    %v111 = vld [vmem:[#allocation5 + $0x20] sm:$0xff]
    %v112 = vld [vmem:[#allocation5 + $0x28] sm:$0xff]
    %v113 = vld [vmem:[#allocation5 + $0x30] sm:$0xff]
    %v114 = vld [vmem:[#allocation5 + $0x38] sm:$0xff]
    %v115 = vpack.c.bf16 %v108, %v107
    %v116 = vpack.c.bf16 %v110, %v109
    %v117 = vpack.c.bf16 %v112, %v111
    %v118 = vpack.c.bf16 %v114, %v113
    %v119 = vld [vmem:[#allocation8] sm:$0xff]
    %v120 = vld [vmem:[#allocation8 + $0x8] sm:$0xff]
    %v121 = vld [vmem:[#allocation8 + $0x10] sm:$0xff]
    %v122 = vld [vmem:[#allocation8 + $0x18] sm:$0xff]
    %v123 = vld [vmem:[#allocation8 + $0x20] sm:$0xff]
    %v124 = vld [vmem:[#allocation8 + $0x28] sm:$0xff]
    %v125 = vld [vmem:[#allocation8 + $0x30] sm:$0xff]
    %v126 = vld [vmem:[#allocation8 + $0x38] sm:$0xff]
    %v135 = vunpack.c.l.b16 %v119
    %v136 = vunpack.c.h.b16 %v119
    %v137 = vunpack.c.l.b16 %v120
    %v138 = vunpack.c.h.b16 %v120
    %v139 = vunpack.c.l.b16 %v121
    %v140 = vunpack.c.h.b16 %v121
    %v141 = vunpack.c.l.b16 %v122
    %v142 = vunpack.c.h.b16 %v122
    %v143 = vunpack.c.l.b16 %v123
    %v144 = vunpack.c.h.b16 %v123
    %v145 = vunpack.c.l.b16 %v124
    %v146 = vunpack.c.h.b16 %v124
    %v147 = vunpack.c.l.b16 %v125
    %v148 = vunpack.c.h.b16 %v125
    %v149 = vunpack.c.l.b16 %v126
    %v150 = vunpack.c.h.b16 %v126
    %v151 = vpack.c.b16 %v139, %v135
    %v152 = vpack.c.b16 %v140, %v136
    %v153 = vpack.c.b16 %v141, %v137
    %v154 = vpack.c.b16 %v142, %v138
    %v155 = vpack.c.b16 %v147, %v143
    %v156 = vpack.c.b16 %v148, %v144
    %v157 = vpack.c.b16 %v149, %v145
    %v158 = vpack.c.b16 %v150, %v146
    %vm167 = vcmask 261120
    %v169 = vsel %vm167, %v115, 0
    %v172 = vsel %vm167, %v116, 0
    %v175 = vsel %vm167, %v117, 0
    %v178 = vsel %vm167, %v118, 0
    %180 = vmatpush.bf16.msra.mxu0 0
    %181 = vmatpush.bf16.msra.mxu0 0
    %182 = vmatpush.bf16.msra.mxu0 0
    %183 = vmatpush.bf16.msra.mxu0 0
    %184 = vmatpush.bf16.msra.mxu0 0
    %185 = vmatpush.bf16.msra.mxu0 0
    %186 = vmatpush.bf16.msra.mxu0 %v155
    %187 = vmatpush.bf16.msra.mxu0 %v151
    %188 = vmatmul.bf16.gmra.mxu0 %v169
    %v189 = vpop.f32.mrf.mxu0
    %v190 = vadd.f32 0.0, %v189
    %v191 = vpop.f32.mrf.mxu0
    %v192 = vadd.f32 0.0, %v191
    %193 = vmatmul.bf16.gmra.mxu0 %v172
    %v194 = vpop.f32.mrf.mxu0
    %v195 = vadd.f32 0.0, %v194
    %v196 = vpop.f32.mrf.mxu0
    %v197 = vadd.f32 0.0, %v196
    %198 = vmatmul.bf16.gmra.mxu0 %v175
    %v199 = vpop.f32.mrf.mxu0
    %v200 = vadd.f32 0.0, %v199
    %v201 = vpop.f32.mrf.mxu0
    %v202 = vadd.f32 0.0, %v201
    %203 = vmatmul.bf16.gmra.mxu0 %v178
    %v204 = vpop.f32.mrf.mxu0
    %v205 = vadd.f32 0.0, %v204
    %v206 = vpop.f32.mrf.mxu0
    %v207 = vadd.f32 0.0, %v206
    %208 = vdwg.mxu0
    %209 = vmatpush.bf16.msra.mxu0 0
    %210 = vmatpush.bf16.msra.mxu0 0
    %211 = vmatpush.bf16.msra.mxu0 0
    %212 = vmatpush.bf16.msra.mxu0 0
    %213 = vmatpush.bf16.msra.mxu0 0
    %214 = vmatpush.bf16.msra.mxu0 0
    %215 = vmatpush.bf16.msra.mxu0 %v156
    %216 = vmatpush.bf16.msra.mxu0 %v152
    %217 = vmatmul.bf16.gmra.mxu0 %v169
    %v218 = vpop.f32.mrf.mxu0
    %v219 = vadd.f32 0.0, %v218
    %v220 = vpop.f32.mrf.mxu0
    %v221 = vadd.f32 0.0, %v220
    %222 = vmatmul.bf16.gmra.mxu0 %v172
    %v223 = vpop.f32.mrf.mxu0
    %v224 = vadd.f32 0.0, %v223
    %v225 = vpop.f32.mrf.mxu0
    %v226 = vadd.f32 0.0, %v225
    %227 = vmatmul.bf16.gmra.mxu0 %v175
    %v228 = vpop.f32.mrf.mxu0
    %v229 = vadd.f32 0.0, %v228
    %v230 = vpop.f32.mrf.mxu0
    %v231 = vadd.f32 0.0, %v230
    %232 = vmatmul.bf16.gmra.mxu0 %v178
    %v233 = vpop.f32.mrf.mxu0
    %v234 = vadd.f32 0.0, %v233
    %v235 = vpop.f32.mrf.mxu0
    %v236 = vadd.f32 0.0, %v235
    %237 = vdwg.mxu0
    %238 = vmatpush.bf16.msra.mxu0 0
    %239 = vmatpush.bf16.msra.mxu0 0
    %240 = vmatpush.bf16.msra.mxu0 0
    %241 = vmatpush.bf16.msra.mxu0 0
    %242 = vmatpush.bf16.msra.mxu0 0
    %243 = vmatpush.bf16.msra.mxu0 0
    %244 = vmatpush.bf16.msra.mxu0 %v157
    %245 = vmatpush.bf16.msra.mxu0 %v153
    %246 = vmatmul.bf16.gmra.mxu0 %v169
    %v247 = vpop.f32.mrf.mxu0
    %v248 = vadd.f32 0.0, %v247
    %v249 = vpop.f32.mrf.mxu0
    %v250 = vadd.f32 0.0, %v249
    %251 = vmatmul.bf16.gmra.mxu0 %v172
    %v252 = vpop.f32.mrf.mxu0
    %v253 = vadd.f32 0.0, %v252
    %v254 = vpop.f32.mrf.mxu0
    %v255 = vadd.f32 0.0, %v254
    %256 = vmatmul.bf16.gmra.mxu0 %v175
    %v257 = vpop.f32.mrf.mxu0
    %v258 = vadd.f32 0.0, %v257
    %v259 = vpop.f32.mrf.mxu0
    %v260 = vadd.f32 0.0, %v259
    %261 = vmatmul.bf16.gmra.mxu0 %v178
    %v262 = vpop.f32.mrf.mxu0
    %v263 = vadd.f32 0.0, %v262
    %v264 = vpop.f32.mrf.mxu0
    %v265 = vadd.f32 0.0, %v264
    %266 = vdwg.mxu0
    %267 = vmatpush.bf16.msra.mxu0 0
    %268 = vmatpush.bf16.msra.mxu0 0
    %269 = vmatpush.bf16.msra.mxu0 0
    %270 = vmatpush.bf16.msra.mxu0 0
    %271 = vmatpush.bf16.msra.mxu0 0
    %272 = vmatpush.bf16.msra.mxu0 0
    %273 = vmatpush.bf16.msra.mxu0 %v158
    %274 = vmatpush.bf16.msra.mxu0 %v154
    %275 = vmatmul.bf16.gmra.mxu0 %v169
    %v276 = vpop.f32.mrf.mxu0
    %v277 = vadd.f32 0.0, %v276
    %v278 = vpop.f32.mrf.mxu0
    %v279 = vadd.f32 0.0, %v278
    %280 = vmatmul.bf16.gmra.mxu0 %v172
    %v281 = vpop.f32.mrf.mxu0
    %v282 = vadd.f32 0.0, %v281
    %v283 = vpop.f32.mrf.mxu0
    %v284 = vadd.f32 0.0, %v283
    %285 = vmatmul.bf16.gmra.mxu0 %v175
    %v286 = vpop.f32.mrf.mxu0
    %v287 = vadd.f32 0.0, %v286
    %v288 = vpop.f32.mrf.mxu0
    %v289 = vadd.f32 0.0, %v288
    %290 = vmatmul.bf16.gmra.mxu0 %v178
    %v291 = vpop.f32.mrf.mxu0
    %v292 = vadd.f32 0.0, %v291
    %v293 = vpop.f32.mrf.mxu0
    %v294 = vadd.f32 0.0, %v293
    %295 = vdwg.mxu0
    %v296 = vld [vmem:[#allocation11] sm:$0xff]
    %v297 = vld [vmem:[#allocation11 + $0x8] sm:$0xff]
    %v298 = vld [vmem:[#allocation11 + $0x10] sm:$0xff]
    %v299 = vld [vmem:[#allocation11 + $0x18] sm:$0xff]
    %v300 = vadd.f32 %v190, %v296
    %v301 = vadd.f32 %v219, %v297
    %v302 = vadd.f32 %v248, %v298
    %v303 = vadd.f32 %v277, %v299
    %v304 = vadd.f32 %v192, %v296
    %v305 = vadd.f32 %v221, %v297
    %v306 = vadd.f32 %v250, %v298
    %v307 = vadd.f32 %v279, %v299
    %v308 = vadd.f32 %v195, %v296
    %v309 = vadd.f32 %v224, %v297
    %v310 = vadd.f32 %v253, %v298
    %v311 = vadd.f32 %v282, %v299
    %v312 = vadd.f32 %v197, %v296
    %v313 = vadd.f32 %v226, %v297
    %v314 = vadd.f32 %v255, %v298
    %v315 = vadd.f32 %v284, %v299
    %v316 = vadd.f32 %v200, %v296
    %v317 = vadd.f32 %v229, %v297
    %v318 = vadd.f32 %v258, %v298
    %v319 = vadd.f32 %v287, %v299
    %v320 = vadd.f32 %v202, %v296
    %v321 = vadd.f32 %v231, %v297
    %v322 = vadd.f32 %v260, %v298
    %v323 = vadd.f32 %v289, %v299
    %v324 = vadd.f32 %v205, %v296
    %v325 = vadd.f32 %v234, %v297
    %v326 = vadd.f32 %v263, %v298
    %v327 = vadd.f32 %v292, %v299
    %v328 = vadd.f32 %v207, %v296
    %v329 = vadd.f32 %v236, %v297
    %v330 = vadd.f32 %v265, %v298
    %v331 = vadd.f32 %v294, %v299
    %332 = vst [vmem:[#allocation4] sm:$0xff] %v300
    %333 = vst [vmem:[#allocation4 + $0x8] sm:$0xff] %v301
    %334 = vst [vmem:[#allocation4 + $0x10] sm:$0xff] %v302
    %335 = vst [vmem:[#allocation4 + $0x18] sm:$0xff] %v303
    %336 = vst [vmem:[#allocation4 + $0x20] sm:$0xff] %v304
    %337 = vst [vmem:[#allocation4 + $0x28] sm:$0xff] %v305
    %338 = vst [vmem:[#allocation4 + $0x30] sm:$0xff] %v306
    %339 = vst [vmem:[#allocation4 + $0x38] sm:$0xff] %v307
    %340 = vst [vmem:[#allocation4 + $0x40] sm:$0xff] %v308
    %341 = vst [vmem:[#allocation4 + $0x48] sm:$0xff] %v309
    %342 = vst [vmem:[#allocation4 + $0x50] sm:$0xff] %v310
    %343 = vst [vmem:[#allocation4 + $0x58] sm:$0xff] %v311
    %344 = vst [vmem:[#allocation4 + $0x60] sm:$0xff] %v312
    %345 = vst [vmem:[#allocation4 + $0x68] sm:$0xff] %v313
    %346 = vst [vmem:[#allocation4 + $0x70] sm:$0xff] %v314
    %347 = vst [vmem:[#allocation4 + $0x78] sm:$0xff] %v315
    %348 = vst [vmem:[#allocation4 + $0x80] sm:$0xff] %v316
    %349 = vst [vmem:[#allocation4 + $0x88] sm:$0xff] %v317
    %350 = vst [vmem:[#allocation4 + $0x90] sm:$0xff] %v318
    %351 = vst [vmem:[#allocation4 + $0x98] sm:$0xff] %v319
    %352 = vst [vmem:[#allocation4 + $0xa0] sm:$0xff] %v320
    %353 = vst [vmem:[#allocation4 + $0xa8] sm:$0xff] %v321
    %354 = vst [vmem:[#allocation4 + $0xb0] sm:$0xff] %v322
    %355 = vst [vmem:[#allocation4 + $0xb8] sm:$0xff] %v323
    %356 = vst [vmem:[#allocation4 + $0xc0] sm:$0xff] %v324
    %357 = vst [vmem:[#allocation4 + $0xc8] sm:$0xff] %v325
    %358 = vst [vmem:[#allocation4 + $0xd0] sm:$0xff] %v326
    %359 = vst [vmem:[#allocation4 + $0xd8] sm:$0xff] %v327
    %360 = vst [vmem:[#allocation4 + $0xe0] sm:$0xff] %v328
    %361 = vst [vmem:[#allocation4 + $0xe8] sm:$0xff] %v329
    %362 = vst [vmem:[#allocation4 + $0xf0] sm:$0xff] %v330
    %363 = vst [vmem:[#allocation4 + $0xf8] sm:$0xff] %v331
    %v364 = vld [vmem:[#allocation10] sm:$0xff]
    %v365 = vld [vmem:[#allocation10 + $0x8] sm:$0xff]
    %v366 = vld [vmem:[#allocation10 + $0x10] sm:$0xff]
    %v367 = vld [vmem:[#allocation10 + $0x18] sm:$0xff]
    %v368 = vld [vmem:[#allocation10 + $0x20] sm:$0xff]
    %v369 = vld [vmem:[#allocation10 + $0x28] sm:$0xff]
    %v370 = vld [vmem:[#allocation10 + $0x30] sm:$0xff]
    %v371 = vld [vmem:[#allocation10 + $0x38] sm:$0xff]
    %v372 = vld [vmem:[#allocation10 + $0x40] sm:$0xff]
    %v373 = vld [vmem:[#allocation10 + $0x48] sm:$0xff]
    %v374 = vld [vmem:[#allocation10 + $0x50] sm:$0xff]
    %v375 = vld [vmem:[#allocation10 + $0x58] sm:$0xff]
    %v376 = vld [vmem:[#allocation10 + $0x60] sm:$0xff]
    %v377 = vld [vmem:[#allocation10 + $0x68] sm:$0xff]
    %v378 = vld [vmem:[#allocation10 + $0x70] sm:$0xff]
    %v379 = vld [vmem:[#allocation10 + $0x78] sm:$0xff]
    %v380 = vld [vmem:[#allocation10 + $0x80] sm:$0xff]
    %v381 = vld [vmem:[#allocation10 + $0x88] sm:$0xff]
    %v382 = vld [vmem:[#allocation10 + $0x90] sm:$0xff]
    %v383 = vld [vmem:[#allocation10 + $0x98] sm:$0xff]
    %v384 = vld [vmem:[#allocation10 + $0xa0] sm:$0xff]
    %v385 = vld [vmem:[#allocation10 + $0xa8] sm:$0xff]
    %v386 = vld [vmem:[#allocation10 + $0xb0] sm:$0xff]
    %v387 = vld [vmem:[#allocation10 + $0xb8] sm:$0xff]
    %v388 = vld [vmem:[#allocation10 + $0xc0] sm:$0xff]
    %v389 = vld [vmem:[#allocation10 + $0xc8] sm:$0xff]
    %v390 = vld [vmem:[#allocation10 + $0xd0] sm:$0xff]
    %v391 = vld [vmem:[#allocation10 + $0xd8] sm:$0xff]
    %v392 = vld [vmem:[#allocation10 + $0xe0] sm:$0xff]
    %v393 = vld [vmem:[#allocation10 + $0xe8] sm:$0xff]
    %v394 = vld [vmem:[#allocation10 + $0xf0] sm:$0xff]
    %v395 = vld [vmem:[#allocation10 + $0xf8] sm:$0xff]
    %v396 = vld [vmem:[#allocation2] sm:$0xff]
    %v397 = vld [vmem:[#allocation3] sm:$0xff]
    %v398 = vld [vmem:[#allocation4] sm:$0xff]
    %v399 = vld [vmem:[#allocation4 + $0x8] sm:$0xff]
    %v400 = vld [vmem:[#allocation4 + $0x10] sm:$0xff]
    %v401 = vld [vmem:[#allocation4 + $0x18] sm:$0xff]
    %v402 = vpack.c.bf16 %v396, %v396
    %v435 = vunpack.c.l.b16 %v364
    %v436 = vunpack.c.h.b16 %v364
    %v437 = vunpack.c.l.b16 %v365
    %v438 = vunpack.c.h.b16 %v365
    %v439 = vunpack.c.l.b16 %v366
    %v440 = vunpack.c.h.b16 %v366
    %v441 = vunpack.c.l.b16 %v367
    %v442 = vunpack.c.h.b16 %v367
    %v443 = vunpack.c.l.b16 %v368
    %v444 = vunpack.c.h.b16 %v368
    %v445 = vunpack.c.l.b16 %v369
    %v446 = vunpack.c.h.b16 %v369
    %v447 = vunpack.c.l.b16 %v370
    %v448 = vunpack.c.h.b16 %v370
    %v449 = vunpack.c.l.b16 %v371
    %v450 = vunpack.c.h.b16 %v371
    %v451 = vunpack.c.l.b16 %v372
    %v452 = vunpack.c.h.b16 %v372
    %v453 = vunpack.c.l.b16 %v373
    %v454 = vunpack.c.h.b16 %v373
    %v455 = vunpack.c.l.b16 %v374
    %v456 = vunpack.c.h.b16 %v374
    %v457 = vunpack.c.l.b16 %v375
    %v458 = vunpack.c.h.b16 %v375
    %v459 = vunpack.c.l.b16 %v376
    %v460 = vunpack.c.h.b16 %v376
    %v461 = vunpack.c.l.b16 %v377
    %v462 = vunpack.c.h.b16 %v377
    %v463 = vunpack.c.l.b16 %v378
    %v464 = vunpack.c.h.b16 %v378
    %v465 = vunpack.c.l.b16 %v379
    %v466 = vunpack.c.h.b16 %v379
    %v467 = vunpack.c.l.b16 %v380
    %v468 = vunpack.c.h.b16 %v380
    %v469 = vunpack.c.l.b16 %v381
    %v470 = vunpack.c.h.b16 %v381
    %v471 = vunpack.c.l.b16 %v382
    %v472 = vunpack.c.h.b16 %v382
    %v473 = vunpack.c.l.b16 %v383
    %v474 = vunpack.c.h.b16 %v383
    %v475 = vunpack.c.l.b16 %v384
    %v476 = vunpack.c.h.b16 %v384
    %v477 = vunpack.c.l.b16 %v385
    %v478 = vunpack.c.h.b16 %v385
    %v479 = vunpack.c.l.b16 %v386
    %v480 = vunpack.c.h.b16 %v386
    %v481 = vunpack.c.l.b16 %v387
    %v482 = vunpack.c.h.b16 %v387
    %v483 = vunpack.c.l.b16 %v388
    %v484 = vunpack.c.h.b16 %v388
    %v485 = vunpack.c.l.b16 %v389
    %v486 = vunpack.c.h.b16 %v389
    %v487 = vunpack.c.l.b16 %v390
    %v488 = vunpack.c.h.b16 %v390
    %v489 = vunpack.c.l.b16 %v391
    %v490 = vunpack.c.h.b16 %v391
    %v491 = vunpack.c.l.b16 %v392
    %v492 = vunpack.c.h.b16 %v392
    %v493 = vunpack.c.l.b16 %v393
    %v494 = vunpack.c.h.b16 %v393
    %v495 = vunpack.c.l.b16 %v394
    %v496 = vunpack.c.h.b16 %v394
    %v497 = vunpack.c.l.b16 %v395
    %v498 = vunpack.c.h.b16 %v395
    %v499 = vpack.c.b16 %v439, %v435
    %v500 = vpack.c.b16 %v440, %v436
    %v501 = vpack.c.b16 %v441, %v437
    %v502 = vpack.c.b16 %v442, %v438
    %v503 = vpack.c.b16 %v447, %v443
    %v504 = vpack.c.b16 %v448, %v444
    %v505 = vpack.c.b16 %v449, %v445
    %v506 = vpack.c.b16 %v450, %v446
    %v507 = vpack.c.b16 %v455, %v451
    %v508 = vpack.c.b16 %v456, %v452
    %v509 = vpack.c.b16 %v457, %v453
    %v510 = vpack.c.b16 %v458, %v454
    %v511 = vpack.c.b16 %v463, %v459
    %v512 = vpack.c.b16 %v464, %v460
    %v513 = vpack.c.b16 %v465, %v461
    %v514 = vpack.c.b16 %v466, %v462
    %v515 = vpack.c.b16 %v471, %v467
    %v516 = vpack.c.b16 %v472, %v468
    %v517 = vpack.c.b16 %v473, %v469
    %v518 = vpack.c.b16 %v474, %v470
    %v519 = vpack.c.b16 %v479, %v475
    %v520 = vpack.c.b16 %v480, %v476
    %v521 = vpack.c.b16 %v481, %v477
    %v522 = vpack.c.b16 %v482, %v478
    %v523 = vpack.c.b16 %v487, %v483
    %v524 = vpack.c.b16 %v488, %v484
    %v525 = vpack.c.b16 %v489, %v485
    %v526 = vpack.c.b16 %v490, %v486
    %v527 = vpack.c.b16 %v495, %v491
    %v528 = vpack.c.b16 %v496, %v492
    %v529 = vpack.c.b16 %v497, %v493
    %v530 = vpack.c.b16 %v498, %v494
    %563 = vmatpush.bf16.msra.mxu0 %v527
    %564 = vmatpush.bf16.msra.mxu0 %v523
    %565 = vmatpush.bf16.msra.mxu0 %v519
    %566 = vmatpush.bf16.msra.mxu0 %v515
    %567 = vmatpush.bf16.msra.mxu0 %v511
    %568 = vmatpush.bf16.msra.mxu0 %v507
    %569 = vmatpush.bf16.msra.mxu0 %v503
    %570 = vmatpush.bf16.msra.mxu0 %v499
    %571 = vmatmul.bf16.gmra.mxu0 %v402
    %v572 = vpop.f32.mrf.mxu0
    %v573 = vadd.f32 0.0, %v572
    %v574 = vpop.f32.mrf.mxu0
    %575 = vdwg.mxu0
    %576 = vmatpush.bf16.msra.mxu0 %v528
    %577 = vmatpush.bf16.msra.mxu0 %v524
    %578 = vmatpush.bf16.msra.mxu0 %v520
    %579 = vmatpush.bf16.msra.mxu0 %v516
    %580 = vmatpush.bf16.msra.mxu0 %v512
    %581 = vmatpush.bf16.msra.mxu0 %v508
    %582 = vmatpush.bf16.msra.mxu0 %v504
    %583 = vmatpush.bf16.msra.mxu0 %v500
    %584 = vmatmul.bf16.gmra.mxu0 %v402
    %v585 = vpop.f32.mrf.mxu0
    %v586 = vadd.f32 0.0, %v585
    %v587 = vpop.f32.mrf.mxu0
    %588 = vdwg.mxu0
    %589 = vmatpush.bf16.msra.mxu0 %v529
    %590 = vmatpush.bf16.msra.mxu0 %v525
    %591 = vmatpush.bf16.msra.mxu0 %v521
    %592 = vmatpush.bf16.msra.mxu0 %v517
    %593 = vmatpush.bf16.msra.mxu0 %v513
    %594 = vmatpush.bf16.msra.mxu0 %v509
    %595 = vmatpush.bf16.msra.mxu0 %v505
    %596 = vmatpush.bf16.msra.mxu0 %v501
    %597 = vmatmul.bf16.gmra.mxu0 %v402
    %v598 = vpop.f32.mrf.mxu0
    %v599 = vadd.f32 0.0, %v598
    %v600 = vpop.f32.mrf.mxu0
    %601 = vdwg.mxu0
    %602 = vmatpush.bf16.msra.mxu0 %v530
    %603 = vmatpush.bf16.msra.mxu0 %v526
    %604 = vmatpush.bf16.msra.mxu0 %v522
    %605 = vmatpush.bf16.msra.mxu0 %v518
    %606 = vmatpush.bf16.msra.mxu0 %v514
    %607 = vmatpush.bf16.msra.mxu0 %v510
    %608 = vmatpush.bf16.msra.mxu0 %v506
    %609 = vmatpush.bf16.msra.mxu0 %v502
    %610 = vmatmul.bf16.gmra.mxu0 %v402
    %v611 = vpop.f32.mrf.mxu0
    %v612 = vadd.f32 0.0, %v611
    %v613 = vpop.f32.mrf.mxu0
    %614 = vdwg.mxu0
    %v615 = vadd.f32 %v398, %v573
    %v616 = vadd.f32 %v399, %v586
    %v617 = vadd.f32 %v400, %v599
    %v618 = vadd.f32 %v401, %v612
    %v619 = vmul.f32 %v615, 0.5
    %v620 = vtanh.pop %v619
    %v621 = vmul.f32 %v620, 0.5
    %v622 = vadd.f32 %v621, 0.5
    %v623 = vmul.f32 %v616, 0.5
    %v624 = vtanh.pop %v623
    %v625 = vmul.f32 %v624, 0.5
    %v626 = vadd.f32 %v625, 0.5
    %v627 = vtanh.pop %v617
    %v628 = vmul.f32 %v618, 0.5
    %v629 = vtanh.pop %v628
    %v630 = vmul.f32 %v629, 0.5
    %v631 = vadd.f32 %v630, 0.5
    %v632 = vmul.f32 %v626, %v397
    %v633 = vmul.f32 %v622, %v627
    %v634 = vadd.f32 %v632, %v633
    %v635 = vtanh.pop %v634
    %v636 = vmul.f32 %v631, %v635
    %s637 = scalar_lea.vmem [#allocation4], 32
    %v638 = vld [vmem:[%s637] sm:$0xff]
    %v639 = vld [vmem:[%s637 + $0x8] sm:$0xff]
    %v640 = vld [vmem:[%s637 + $0x10] sm:$0xff]
    %v641 = vld [vmem:[%s637 + $0x18] sm:$0xff]
    %v642 = vpack.c.bf16 %v636, %v636
    %643 = vmatpush.bf16.msra.mxu0 %v527
    %644 = vmatpush.bf16.msra.mxu0 %v523
    %645 = vmatpush.bf16.msra.mxu0 %v519
    %646 = vmatpush.bf16.msra.mxu0 %v515
    %647 = vmatpush.bf16.msra.mxu0 %v511
    %648 = vmatpush.bf16.msra.mxu0 %v507
    %649 = vmatpush.bf16.msra.mxu0 %v503
    %650 = vmatpush.bf16.msra.mxu0 %v499
    %651 = vmatmul.bf16.gmra.mxu0 %v642
    %v652 = vpop.f32.mrf.mxu0
    %v653 = vadd.f32 0.0, %v652
    %v654 = vpop.f32.mrf.mxu0
    %655 = vdwg.mxu0
    %656 = vmatpush.bf16.msra.mxu0 %v528
    %657 = vmatpush.bf16.msra.mxu0 %v524
    %658 = vmatpush.bf16.msra.mxu0 %v520
    %659 = vmatpush.bf16.msra.mxu0 %v516
    %660 = vmatpush.bf16.msra.mxu0 %v512
    %661 = vmatpush.bf16.msra.mxu0 %v508
    %662 = vmatpush.bf16.msra.mxu0 %v504
    %663 = vmatpush.bf16.msra.mxu0 %v500
    %664 = vmatmul.bf16.gmra.mxu0 %v642
    %v665 = vpop.f32.mrf.mxu0
    %v666 = vadd.f32 0.0, %v665
    %v667 = vpop.f32.mrf.mxu0
    %668 = vdwg.mxu0
    %669 = vmatpush.bf16.msra.mxu0 %v529
    %670 = vmatpush.bf16.msra.mxu0 %v525
    %671 = vmatpush.bf16.msra.mxu0 %v521
    %672 = vmatpush.bf16.msra.mxu0 %v517
    %673 = vmatpush.bf16.msra.mxu0 %v513
    %674 = vmatpush.bf16.msra.mxu0 %v509
    %675 = vmatpush.bf16.msra.mxu0 %v505
    %676 = vmatpush.bf16.msra.mxu0 %v501
    %677 = vmatmul.bf16.gmra.mxu0 %v642
    %v678 = vpop.f32.mrf.mxu0
    %v679 = vadd.f32 0.0, %v678
    %v680 = vpop.f32.mrf.mxu0
    %681 = vdwg.mxu0
    %682 = vmatpush.bf16.msra.mxu0 %v530
    %683 = vmatpush.bf16.msra.mxu0 %v526
    %684 = vmatpush.bf16.msra.mxu0 %v522
    %685 = vmatpush.bf16.msra.mxu0 %v518
    %686 = vmatpush.bf16.msra.mxu0 %v514
    %687 = vmatpush.bf16.msra.mxu0 %v510
    %688 = vmatpush.bf16.msra.mxu0 %v506
    %689 = vmatpush.bf16.msra.mxu0 %v502
    %690 = vmatmul.bf16.gmra.mxu0 %v642
    %v691 = vpop.f32.mrf.mxu0
    %v692 = vadd.f32 0.0, %v691
    %v693 = vpop.f32.mrf.mxu0
    %694 = vdwg.mxu0
    %v695 = vadd.f32 %v638, %v653
    %v696 = vadd.f32 %v639, %v666
    %v697 = vadd.f32 %v640, %v679
    %v698 = vadd.f32 %v641, %v692
    %v699 = vmul.f32 %v695, 0.5
    %v700 = vtanh.pop %v699
    %v701 = vmul.f32 %v700, 0.5
    %v702 = vadd.f32 %v701, 0.5
    %v703 = vmul.f32 %v696, 0.5
    %v704 = vtanh.pop %v703
    %v705 = vmul.f32 %v704, 0.5
    %v706 = vadd.f32 %v705, 0.5
    %v707 = vtanh.pop %v697
    %v708 = vmul.f32 %v698, 0.5
    %v709 = vtanh.pop %v708
    %v710 = vmul.f32 %v709, 0.5
    %v711 = vadd.f32 %v710, 0.5
    %v712 = vmul.f32 %v706, %v634
    %v713 = vmul.f32 %v702, %v707
    %v714 = vadd.f32 %v712, %v713
    %v715 = vtanh.pop %v714
    %v716 = vmul.f32 %v711, %v715
    %s717 = scalar_lea.vmem [#allocation4], 64
    %v718 = vld [vmem:[%s717] sm:$0xff]
    %v719 = vld [vmem:[%s717 + $0x8] sm:$0xff]
    %v720 = vld [vmem:[%s717 + $0x10] sm:$0xff]
    %v721 = vld [vmem:[%s717 + $0x18] sm:$0xff]
    %v722 = vpack.c.bf16 %v716, %v716
    %723 = vmatpush.bf16.msra.mxu0 %v527
    %724 = vmatpush.bf16.msra.mxu0 %v523
    %725 = vmatpush.bf16.msra.mxu0 %v519
    %726 = vmatpush.bf16.msra.mxu0 %v515
    %727 = vmatpush.bf16.msra.mxu0 %v511
    %728 = vmatpush.bf16.msra.mxu0 %v507
    %729 = vmatpush.bf16.msra.mxu0 %v503
    %730 = vmatpush.bf16.msra.mxu0 %v499
    %731 = vmatmul.bf16.gmra.mxu0 %v722
    %v732 = vpop.f32.mrf.mxu0
    %v733 = vadd.f32 0.0, %v732
    %v734 = vpop.f32.mrf.mxu0
    %735 = vdwg.mxu0
    %736 = vmatpush.bf16.msra.mxu0 %v528
    %737 = vmatpush.bf16.msra.mxu0 %v524
    %738 = vmatpush.bf16.msra.mxu0 %v520
    %739 = vmatpush.bf16.msra.mxu0 %v516
    %740 = vmatpush.bf16.msra.mxu0 %v512
    %741 = vmatpush.bf16.msra.mxu0 %v508
    %742 = vmatpush.bf16.msra.mxu0 %v504
    %743 = vmatpush.bf16.msra.mxu0 %v500
    %744 = vmatmul.bf16.gmra.mxu0 %v722
    %v745 = vpop.f32.mrf.mxu0
    %v746 = vadd.f32 0.0, %v745
    %v747 = vpop.f32.mrf.mxu0
    %748 = vdwg.mxu0
    %749 = vmatpush.bf16.msra.mxu0 %v529
    %750 = vmatpush.bf16.msra.mxu0 %v525
    %751 = vmatpush.bf16.msra.mxu0 %v521
    %752 = vmatpush.bf16.msra.mxu0 %v517
    %753 = vmatpush.bf16.msra.mxu0 %v513
    %754 = vmatpush.bf16.msra.mxu0 %v509
    %755 = vmatpush.bf16.msra.mxu0 %v505
    %756 = vmatpush.bf16.msra.mxu0 %v501
    %757 = vmatmul.bf16.gmra.mxu0 %v722
    %v758 = vpop.f32.mrf.mxu0
    %v759 = vadd.f32 0.0, %v758
    %v760 = vpop.f32.mrf.mxu0
    %761 = vdwg.mxu0
    %762 = vmatpush.bf16.msra.mxu0 %v530
    %763 = vmatpush.bf16.msra.mxu0 %v526
    %764 = vmatpush.bf16.msra.mxu0 %v522
    %765 = vmatpush.bf16.msra.mxu0 %v518
    %766 = vmatpush.bf16.msra.mxu0 %v514
    %767 = vmatpush.bf16.msra.mxu0 %v510
    %768 = vmatpush.bf16.msra.mxu0 %v506
    %769 = vmatpush.bf16.msra.mxu0 %v502
    %770 = vmatmul.bf16.gmra.mxu0 %v722
    %v771 = vpop.f32.mrf.mxu0
    %v772 = vadd.f32 0.0, %v771
    %v773 = vpop.f32.mrf.mxu0
    %774 = vdwg.mxu0
    %v775 = vadd.f32 %v718, %v733
    %v776 = vadd.f32 %v719, %v746
    %v777 = vadd.f32 %v720, %v759
    %v778 = vadd.f32 %v721, %v772
    %v779 = vmul.f32 %v775, 0.5
    %v780 = vtanh.pop %v779
    %v781 = vmul.f32 %v780, 0.5
    %v782 = vadd.f32 %v781, 0.5
    %v783 = vmul.f32 %v776, 0.5
    %v784 = vtanh.pop %v783
    %v785 = vmul.f32 %v784, 0.5
    %v786 = vadd.f32 %v785, 0.5
    %v787 = vtanh.pop %v777
    %v788 = vmul.f32 %v778, 0.5
    %v789 = vtanh.pop %v788
    %v790 = vmul.f32 %v789, 0.5
    %v791 = vadd.f32 %v790, 0.5
    %v792 = vmul.f32 %v786, %v714
    %v793 = vmul.f32 %v782, %v787
    %v794 = vadd.f32 %v792, %v793
    %v795 = vtanh.pop %v794
    %v796 = vmul.f32 %v791, %v795
    %s797 = scalar_lea.vmem [#allocation4], 96
    %v798 = vld [vmem:[%s797] sm:$0xff]
    %v799 = vld [vmem:[%s797 + $0x8] sm:$0xff]
    %v800 = vld [vmem:[%s797 + $0x10] sm:$0xff]
    %v801 = vld [vmem:[%s797 + $0x18] sm:$0xff]
    %v802 = vpack.c.bf16 %v796, %v796
    %803 = vmatpush.bf16.msra.mxu0 %v527
    %804 = vmatpush.bf16.msra.mxu0 %v523
    %805 = vmatpush.bf16.msra.mxu0 %v519
    %806 = vmatpush.bf16.msra.mxu0 %v515
    %807 = vmatpush.bf16.msra.mxu0 %v511
    %808 = vmatpush.bf16.msra.mxu0 %v507
    %809 = vmatpush.bf16.msra.mxu0 %v503
    %810 = vmatpush.bf16.msra.mxu0 %v499
    %811 = vmatmul.bf16.gmra.mxu0 %v802
    %v812 = vpop.f32.mrf.mxu0
    %v813 = vadd.f32 0.0, %v812
    %v814 = vpop.f32.mrf.mxu0
    %815 = vdwg.mxu0
    %816 = vmatpush.bf16.msra.mxu0 %v528
    %817 = vmatpush.bf16.msra.mxu0 %v524
    %818 = vmatpush.bf16.msra.mxu0 %v520
    %819 = vmatpush.bf16.msra.mxu0 %v516
    %820 = vmatpush.bf16.msra.mxu0 %v512
    %821 = vmatpush.bf16.msra.mxu0 %v508
    %822 = vmatpush.bf16.msra.mxu0 %v504
    %823 = vmatpush.bf16.msra.mxu0 %v500
    %824 = vmatmul.bf16.gmra.mxu0 %v802
    %v825 = vpop.f32.mrf.mxu0
    %v826 = vadd.f32 0.0, %v825
    %v827 = vpop.f32.mrf.mxu0
    %828 = vdwg.mxu0
    %829 = vmatpush.bf16.msra.mxu0 %v529
    %830 = vmatpush.bf16.msra.mxu0 %v525
    %831 = vmatpush.bf16.msra.mxu0 %v521
    %832 = vmatpush.bf16.msra.mxu0 %v517
    %833 = vmatpush.bf16.msra.mxu0 %v513
    %834 = vmatpush.bf16.msra.mxu0 %v509
    %835 = vmatpush.bf16.msra.mxu0 %v505
    %836 = vmatpush.bf16.msra.mxu0 %v501
    %837 = vmatmul.bf16.gmra.mxu0 %v802
    %v838 = vpop.f32.mrf.mxu0
    %v839 = vadd.f32 0.0, %v838
    %v840 = vpop.f32.mrf.mxu0
    %841 = vdwg.mxu0
    %842 = vmatpush.bf16.msra.mxu0 %v530
    %843 = vmatpush.bf16.msra.mxu0 %v526
    %844 = vmatpush.bf16.msra.mxu0 %v522
    %845 = vmatpush.bf16.msra.mxu0 %v518
    %846 = vmatpush.bf16.msra.mxu0 %v514
    %847 = vmatpush.bf16.msra.mxu0 %v510
    %848 = vmatpush.bf16.msra.mxu0 %v506
    %849 = vmatpush.bf16.msra.mxu0 %v502
    %850 = vmatmul.bf16.gmra.mxu0 %v802
    %v851 = vpop.f32.mrf.mxu0
    %v852 = vadd.f32 0.0, %v851
    %v853 = vpop.f32.mrf.mxu0
    %854 = vdwg.mxu0
    %v855 = vadd.f32 %v798, %v813
    %v856 = vadd.f32 %v799, %v826
    %v857 = vadd.f32 %v800, %v839
    %v858 = vadd.f32 %v801, %v852
    %v859 = vmul.f32 %v855, 0.5
    %v860 = vtanh.pop %v859
    %v861 = vmul.f32 %v860, 0.5
    %v862 = vadd.f32 %v861, 0.5
    %v863 = vmul.f32 %v856, 0.5
    %v864 = vtanh.pop %v863
    %v865 = vmul.f32 %v864, 0.5
    %v866 = vadd.f32 %v865, 0.5
    %v867 = vtanh.pop %v857
    %v868 = vmul.f32 %v858, 0.5
    %v869 = vtanh.pop %v868
    %v870 = vmul.f32 %v869, 0.5
    %v871 = vadd.f32 %v870, 0.5
    %v872 = vmul.f32 %v866, %v794
    %v873 = vmul.f32 %v862, %v867
    %v874 = vadd.f32 %v872, %v873
    %v875 = vtanh.pop %v874
    %v876 = vmul.f32 %v871, %v875
    %s877 = scalar_lea.vmem [#allocation4], 128
    %v878 = vld [vmem:[%s877] sm:$0xff]
    %v879 = vld [vmem:[%s877 + $0x8] sm:$0xff]
    %v880 = vld [vmem:[%s877 + $0x10] sm:$0xff]
    %v881 = vld [vmem:[%s877 + $0x18] sm:$0xff]
    %v882 = vpack.c.bf16 %v876, %v876
    %883 = vmatpush.bf16.msra.mxu0 %v527
    %884 = vmatpush.bf16.msra.mxu0 %v523
    %885 = vmatpush.bf16.msra.mxu0 %v519
    %886 = vmatpush.bf16.msra.mxu0 %v515
    %887 = vmatpush.bf16.msra.mxu0 %v511
    %888 = vmatpush.bf16.msra.mxu0 %v507
    %889 = vmatpush.bf16.msra.mxu0 %v503
    %890 = vmatpush.bf16.msra.mxu0 %v499
    %891 = vmatmul.bf16.gmra.mxu0 %v882
    %v892 = vpop.f32.mrf.mxu0
    %v893 = vadd.f32 0.0, %v892
    %v894 = vpop.f32.mrf.mxu0
    %895 = vdwg.mxu0
    %896 = vmatpush.bf16.msra.mxu0 %v528
    %897 = vmatpush.bf16.msra.mxu0 %v524
    %898 = vmatpush.bf16.msra.mxu0 %v520
    %899 = vmatpush.bf16.msra.mxu0 %v516
    %900 = vmatpush.bf16.msra.mxu0 %v512
    %901 = vmatpush.bf16.msra.mxu0 %v508
    %902 = vmatpush.bf16.msra.mxu0 %v504
    %903 = vmatpush.bf16.msra.mxu0 %v500
    %904 = vmatmul.bf16.gmra.mxu0 %v882
    %v905 = vpop.f32.mrf.mxu0
    %v906 = vadd.f32 0.0, %v905
    %v907 = vpop.f32.mrf.mxu0
    %908 = vdwg.mxu0
    %909 = vmatpush.bf16.msra.mxu0 %v529
    %910 = vmatpush.bf16.msra.mxu0 %v525
    %911 = vmatpush.bf16.msra.mxu0 %v521
    %912 = vmatpush.bf16.msra.mxu0 %v517
    %913 = vmatpush.bf16.msra.mxu0 %v513
    %914 = vmatpush.bf16.msra.mxu0 %v509
    %915 = vmatpush.bf16.msra.mxu0 %v505
    %916 = vmatpush.bf16.msra.mxu0 %v501
    %917 = vmatmul.bf16.gmra.mxu0 %v882
    %v918 = vpop.f32.mrf.mxu0
    %v919 = vadd.f32 0.0, %v918
    %v920 = vpop.f32.mrf.mxu0
    %921 = vdwg.mxu0
    %922 = vmatpush.bf16.msra.mxu0 %v530
    %923 = vmatpush.bf16.msra.mxu0 %v526
    %924 = vmatpush.bf16.msra.mxu0 %v522
    %925 = vmatpush.bf16.msra.mxu0 %v518
    %926 = vmatpush.bf16.msra.mxu0 %v514
    %927 = vmatpush.bf16.msra.mxu0 %v510
    %928 = vmatpush.bf16.msra.mxu0 %v506
    %929 = vmatpush.bf16.msra.mxu0 %v502
    %930 = vmatmul.bf16.gmra.mxu0 %v882
    %v931 = vpop.f32.mrf.mxu0
    %v932 = vadd.f32 0.0, %v931
    %v933 = vpop.f32.mrf.mxu0
    %934 = vdwg.mxu0
    %v935 = vadd.f32 %v878, %v893
    %v936 = vadd.f32 %v879, %v906
    %v937 = vadd.f32 %v880, %v919
    %v938 = vadd.f32 %v881, %v932
    %v939 = vmul.f32 %v935, 0.5
    %v940 = vtanh.pop %v939
    %v941 = vmul.f32 %v940, 0.5
    %v942 = vadd.f32 %v941, 0.5
    %v943 = vmul.f32 %v936, 0.5
    %v944 = vtanh.pop %v943
    %v945 = vmul.f32 %v944, 0.5
    %v946 = vadd.f32 %v945, 0.5
    %v947 = vtanh.pop %v937
    %v948 = vmul.f32 %v938, 0.5
    %v949 = vtanh.pop %v948
    %v950 = vmul.f32 %v949, 0.5
    %v951 = vadd.f32 %v950, 0.5
    %v952 = vmul.f32 %v946, %v874
    %v953 = vmul.f32 %v942, %v947
    %v954 = vadd.f32 %v952, %v953
    %v955 = vtanh.pop %v954
    %v956 = vmul.f32 %v951, %v955
    %s957 = scalar_lea.vmem [#allocation4], 160
    %v958 = vld [vmem:[%s957] sm:$0xff]
    %v959 = vld [vmem:[%s957 + $0x8] sm:$0xff]
    %v960 = vld [vmem:[%s957 + $0x10] sm:$0xff]
    %v961 = vld [vmem:[%s957 + $0x18] sm:$0xff]
    %v962 = vpack.c.bf16 %v956, %v956
    %963 = vmatpush.bf16.msra.mxu0 %v527
    %964 = vmatpush.bf16.msra.mxu0 %v523
    %965 = vmatpush.bf16.msra.mxu0 %v519
    %966 = vmatpush.bf16.msra.mxu0 %v515
    %967 = vmatpush.bf16.msra.mxu0 %v511
    %968 = vmatpush.bf16.msra.mxu0 %v507
    %969 = vmatpush.bf16.msra.mxu0 %v503
    %970 = vmatpush.bf16.msra.mxu0 %v499
    %971 = vmatmul.bf16.gmra.mxu0 %v962
    %v972 = vpop.f32.mrf.mxu0
    %v973 = vadd.f32 0.0, %v972
    %v974 = vpop.f32.mrf.mxu0
    %975 = vdwg.mxu0
    %976 = vmatpush.bf16.msra.mxu0 %v528
    %977 = vmatpush.bf16.msra.mxu0 %v524
    %978 = vmatpush.bf16.msra.mxu0 %v520
    %979 = vmatpush.bf16.msra.mxu0 %v516
    %980 = vmatpush.bf16.msra.mxu0 %v512
    %981 = vmatpush.bf16.msra.mxu0 %v508
    %982 = vmatpush.bf16.msra.mxu0 %v504
    %983 = vmatpush.bf16.msra.mxu0 %v500
    %984 = vmatmul.bf16.gmra.mxu0 %v962
    %v985 = vpop.f32.mrf.mxu0
    %v986 = vadd.f32 0.0, %v985
    %v987 = vpop.f32.mrf.mxu0
    %988 = vdwg.mxu0
    %989 = vmatpush.bf16.msra.mxu0 %v529
    %990 = vmatpush.bf16.msra.mxu0 %v525
    %991 = vmatpush.bf16.msra.mxu0 %v521
    %992 = vmatpush.bf16.msra.mxu0 %v517
    %993 = vmatpush.bf16.msra.mxu0 %v513
    %994 = vmatpush.bf16.msra.mxu0 %v509
    %995 = vmatpush.bf16.msra.mxu0 %v505
    %996 = vmatpush.bf16.msra.mxu0 %v501
    %997 = vmatmul.bf16.gmra.mxu0 %v962
    %v998 = vpop.f32.mrf.mxu0
    %v999 = vadd.f32 0.0, %v998
    %v1000 = vpop.f32.mrf.mxu0
    %1001 = vdwg.mxu0
    %1002 = vmatpush.bf16.msra.mxu0 %v530
    %1003 = vmatpush.bf16.msra.mxu0 %v526
    %1004 = vmatpush.bf16.msra.mxu0 %v522
    %1005 = vmatpush.bf16.msra.mxu0 %v518
    %1006 = vmatpush.bf16.msra.mxu0 %v514
    %1007 = vmatpush.bf16.msra.mxu0 %v510
    %1008 = vmatpush.bf16.msra.mxu0 %v506
    %1009 = vmatpush.bf16.msra.mxu0 %v502
    %1010 = vmatmul.bf16.gmra.mxu0 %v962
    %v1011 = vpop.f32.mrf.mxu0
    %v1012 = vadd.f32 0.0, %v1011
    %v1013 = vpop.f32.mrf.mxu0
    %1014 = vdwg.mxu0
    %v1015 = vadd.f32 %v958, %v973
    %v1016 = vadd.f32 %v959, %v986
    %v1017 = vadd.f32 %v960, %v999
    %v1018 = vadd.f32 %v961, %v1012
    %v1019 = vmul.f32 %v1015, 0.5
    %v1020 = vtanh.pop %v1019
    %v1021 = vmul.f32 %v1020, 0.5
    %v1022 = vadd.f32 %v1021, 0.5
    %v1023 = vmul.f32 %v1016, 0.5
    %v1024 = vtanh.pop %v1023
    %v1025 = vmul.f32 %v1024, 0.5
    %v1026 = vadd.f32 %v1025, 0.5
    %v1027 = vtanh.pop %v1017
    %v1028 = vmul.f32 %v1018, 0.5
    %v1029 = vtanh.pop %v1028
    %v1030 = vmul.f32 %v1029, 0.5
    %v1031 = vadd.f32 %v1030, 0.5
    %v1032 = vmul.f32 %v1026, %v954
    %v1033 = vmul.f32 %v1022, %v1027
    %v1034 = vadd.f32 %v1032, %v1033
    %v1035 = vtanh.pop %v1034
    %v1036 = vmul.f32 %v1031, %v1035
    %s1037 = scalar_lea.vmem [#allocation4], 192
    %v1038 = vld [vmem:[%s1037] sm:$0xff]
    %v1039 = vld [vmem:[%s1037 + $0x8] sm:$0xff]
    %v1040 = vld [vmem:[%s1037 + $0x10] sm:$0xff]
    %v1041 = vld [vmem:[%s1037 + $0x18] sm:$0xff]
    %v1042 = vpack.c.bf16 %v1036, %v1036
    %1043 = vmatpush.bf16.msra.mxu0 %v527
    %1044 = vmatpush.bf16.msra.mxu0 %v523
    %1045 = vmatpush.bf16.msra.mxu0 %v519
    %1046 = vmatpush.bf16.msra.mxu0 %v515
    %1047 = vmatpush.bf16.msra.mxu0 %v511
    %1048 = vmatpush.bf16.msra.mxu0 %v507
    %1049 = vmatpush.bf16.msra.mxu0 %v503
    %1050 = vmatpush.bf16.msra.mxu0 %v499
    %1051 = vmatmul.bf16.gmra.mxu0 %v1042
    %v1052 = vpop.f32.mrf.mxu0
    %v1053 = vadd.f32 0.0, %v1052
    %v1054 = vpop.f32.mrf.mxu0
    %1055 = vdwg.mxu0
    %1056 = vmatpush.bf16.msra.mxu0 %v528
    %1057 = vmatpush.bf16.msra.mxu0 %v524
    %1058 = vmatpush.bf16.msra.mxu0 %v520
    %1059 = vmatpush.bf16.msra.mxu0 %v516
    %1060 = vmatpush.bf16.msra.mxu0 %v512
    %1061 = vmatpush.bf16.msra.mxu0 %v508
    %1062 = vmatpush.bf16.msra.mxu0 %v504
    %1063 = vmatpush.bf16.msra.mxu0 %v500
    %1064 = vmatmul.bf16.gmra.mxu0 %v1042
    %v1065 = vpop.f32.mrf.mxu0
    %v1066 = vadd.f32 0.0, %v1065
    %v1067 = vpop.f32.mrf.mxu0
    %1068 = vdwg.mxu0
    %1069 = vmatpush.bf16.msra.mxu0 %v529
    %1070 = vmatpush.bf16.msra.mxu0 %v525
    %1071 = vmatpush.bf16.msra.mxu0 %v521
    %1072 = vmatpush.bf16.msra.mxu0 %v517
    %1073 = vmatpush.bf16.msra.mxu0 %v513
    %1074 = vmatpush.bf16.msra.mxu0 %v509
    %1075 = vmatpush.bf16.msra.mxu0 %v505
    %1076 = vmatpush.bf16.msra.mxu0 %v501
    %1077 = vmatmul.bf16.gmra.mxu0 %v1042
    %v1078 = vpop.f32.mrf.mxu0
    %v1079 = vadd.f32 0.0, %v1078
    %v1080 = vpop.f32.mrf.mxu0
    %1081 = vdwg.mxu0
    %1082 = vmatpush.bf16.msra.mxu0 %v530
    %1083 = vmatpush.bf16.msra.mxu0 %v526
    %1084 = vmatpush.bf16.msra.mxu0 %v522
    %1085 = vmatpush.bf16.msra.mxu0 %v518
    %1086 = vmatpush.bf16.msra.mxu0 %v514
    %1087 = vmatpush.bf16.msra.mxu0 %v510
    %1088 = vmatpush.bf16.msra.mxu0 %v506
    %1089 = vmatpush.bf16.msra.mxu0 %v502
    %1090 = vmatmul.bf16.gmra.mxu0 %v1042
    %v1091 = vpop.f32.mrf.mxu0
    %v1092 = vadd.f32 0.0, %v1091
    %v1093 = vpop.f32.mrf.mxu0
    %1094 = vdwg.mxu0
    %v1095 = vadd.f32 %v1038, %v1053
    %v1096 = vadd.f32 %v1039, %v1066
    %v1097 = vadd.f32 %v1040, %v1079
    %v1098 = vadd.f32 %v1041, %v1092
    %v1099 = vmul.f32 %v1095, 0.5
    %v1100 = vtanh.pop %v1099
    %v1101 = vmul.f32 %v1100, 0.5
    %v1102 = vadd.f32 %v1101, 0.5
    %v1103 = vmul.f32 %v1096, 0.5
    %v1104 = vtanh.pop %v1103
    %v1105 = vmul.f32 %v1104, 0.5
    %v1106 = vadd.f32 %v1105, 0.5
    %v1107 = vtanh.pop %v1097
    %v1108 = vmul.f32 %v1098, 0.5
    %v1109 = vtanh.pop %v1108
    %v1110 = vmul.f32 %v1109, 0.5
    %v1111 = vadd.f32 %v1110, 0.5
    %v1112 = vmul.f32 %v1106, %v1034
    %v1113 = vmul.f32 %v1102, %v1107
    %v1114 = vadd.f32 %v1112, %v1113
    %v1115 = vtanh.pop %v1114
    %v1116 = vmul.f32 %v1111, %v1115
    %s1117 = scalar_lea.vmem [#allocation4], 224
    %v1118 = vld [vmem:[%s1117] sm:$0xff]
    %v1119 = vld [vmem:[%s1117 + $0x8] sm:$0xff]
    %v1120 = vld [vmem:[%s1117 + $0x10] sm:$0xff]
    %v1121 = vld [vmem:[%s1117 + $0x18] sm:$0xff]
    %v1122 = vpack.c.bf16 %v1116, %v1116
    %1123 = vmatpush.bf16.msra.mxu0 %v527
    %1124 = vmatpush.bf16.msra.mxu0 %v523
    %1125 = vmatpush.bf16.msra.mxu0 %v519
    %1126 = vmatpush.bf16.msra.mxu0 %v515
    %1127 = vmatpush.bf16.msra.mxu0 %v511
    %1128 = vmatpush.bf16.msra.mxu0 %v507
    %1129 = vmatpush.bf16.msra.mxu0 %v503
    %1130 = vmatpush.bf16.msra.mxu0 %v499
    %1131 = vmatmul.bf16.gmra.mxu0 %v1122
    %v1132 = vpop.f32.mrf.mxu0
    %v1133 = vadd.f32 0.0, %v1132
    %v1134 = vpop.f32.mrf.mxu0
    %1135 = vdwg.mxu0
    %1136 = vmatpush.bf16.msra.mxu0 %v528
    %1137 = vmatpush.bf16.msra.mxu0 %v524
    %1138 = vmatpush.bf16.msra.mxu0 %v520
    %1139 = vmatpush.bf16.msra.mxu0 %v516
    %1140 = vmatpush.bf16.msra.mxu0 %v512
    %1141 = vmatpush.bf16.msra.mxu0 %v508
    %1142 = vmatpush.bf16.msra.mxu0 %v504
    %1143 = vmatpush.bf16.msra.mxu0 %v500
    %1144 = vmatmul.bf16.gmra.mxu0 %v1122
    %v1145 = vpop.f32.mrf.mxu0
    %v1146 = vadd.f32 0.0, %v1145
    %v1147 = vpop.f32.mrf.mxu0
    %1148 = vdwg.mxu0
    %1149 = vmatpush.bf16.msra.mxu0 %v529
    %1150 = vmatpush.bf16.msra.mxu0 %v525
    %1151 = vmatpush.bf16.msra.mxu0 %v521
    %1152 = vmatpush.bf16.msra.mxu0 %v517
    %1153 = vmatpush.bf16.msra.mxu0 %v513
    %1154 = vmatpush.bf16.msra.mxu0 %v509
    %1155 = vmatpush.bf16.msra.mxu0 %v505
    %1156 = vmatpush.bf16.msra.mxu0 %v501
    %1157 = vmatmul.bf16.gmra.mxu0 %v1122
    %v1158 = vpop.f32.mrf.mxu0
    %v1159 = vadd.f32 0.0, %v1158
    %v1160 = vpop.f32.mrf.mxu0
    %1161 = vdwg.mxu0
    %1162 = vmatpush.bf16.msra.mxu0 %v530
    %1163 = vmatpush.bf16.msra.mxu0 %v526
    %1164 = vmatpush.bf16.msra.mxu0 %v522
    %1165 = vmatpush.bf16.msra.mxu0 %v518
    %1166 = vmatpush.bf16.msra.mxu0 %v514
    %1167 = vmatpush.bf16.msra.mxu0 %v510
    %1168 = vmatpush.bf16.msra.mxu0 %v506
    %1169 = vmatpush.bf16.msra.mxu0 %v502
    %1170 = vmatmul.bf16.gmra.mxu0 %v1122
    %v1171 = vpop.f32.mrf.mxu0
    %v1172 = vadd.f32 0.0, %v1171
    %v1173 = vpop.f32.mrf.mxu0
    %1174 = vdwg.mxu0
    %v1175 = vadd.f32 %v1118, %v1133
    %v1176 = vadd.f32 %v1119, %v1146
    %v1177 = vadd.f32 %v1120, %v1159
    %v1178 = vadd.f32 %v1121, %v1172
    %v1179 = vmul.f32 %v1175, 0.5
    %v1180 = vtanh.pop %v1179
    %v1181 = vmul.f32 %v1180, 0.5
    %v1182 = vadd.f32 %v1181, 0.5
    %v1183 = vmul.f32 %v1176, 0.5
    %v1184 = vtanh.pop %v1183
    %v1185 = vmul.f32 %v1184, 0.5
    %v1186 = vadd.f32 %v1185, 0.5
    %v1187 = vtanh.pop %v1177
    %v1188 = vmul.f32 %v1178, 0.5
    %v1189 = vtanh.pop %v1188
    %v1190 = vmul.f32 %v1189, 0.5
    %v1191 = vadd.f32 %v1190, 0.5
    %v1192 = vmul.f32 %v1186, %v1114
    %v1193 = vmul.f32 %v1182, %v1187
    %v1194 = vadd.f32 %v1192, %v1193
    %v1195 = vtanh.pop %v1194
    %v1196 = vmul.f32 %v1191, %v1195
    %1197 = vst [vmem:[#allocation2] sm:$0xff] %v1196
    %1198 = vst [vmem:[#allocation3] sm:$0xff] %v1194
    // Predicated region
    $region50: #{tpu_custom_call.1} parent=1 // pred_check
      %p1199 = pneg %p101
    $region51: #{tpu_custom_call.1} parent=1 // pred_check_branch
      %1201 = sbr.rel (%p1199) target = $region53
    $region52: #{tpu_custom_call.1} parent=1 // pred_region
      %v1202 = vpack.c.bf16 %v1196, %v1196
      %v1203 = vld [vmem:[#allocation13] sm:$0xf]
      %v1204 = vld [vmem:[#allocation13 + $0x4] sm:$0xf]
      %v1205 = vld [vmem:[#allocation13 + $0x8] sm:$0xf]
      %v1206 = vld [vmem:[#allocation13 + $0xc] sm:$0xf]
      %v1207 = vld [vmem:[#allocation13 + $0x10] sm:$0xf]
      %v1208 = vld [vmem:[#allocation13 + $0x14] sm:$0xf]
      %v1209 = vld [vmem:[#allocation13 + $0x18] sm:$0xf]
      %v1210 = vld [vmem:[#allocation13 + $0x1c] sm:$0xf]
      %v1211 = vld [vmem:[#allocation13 + $0x20] sm:$0xf]
      %v1212 = vld [vmem:[#allocation13 + $0x24] sm:$0xf]
      %v1213 = vld [vmem:[#allocation13 + $0x28] sm:$0xf]
      %v1214 = vld [vmem:[#allocation13 + $0x2c] sm:$0xf]
      %v1215 = vld [vmem:[#allocation13 + $0x30] sm:$0xf]
      %v1216 = vld [vmem:[#allocation13 + $0x34] sm:$0xf]
      %v1217 = vld [vmem:[#allocation13 + $0x38] sm:$0xf]
      %v1218 = vld [vmem:[#allocation13 + $0x3c] sm:$0xf]
      %v1219 = vld [vmem:[%s5] sm:$0x1]
      %v1221 = vperm.slane %v1219, 0
      %v1239 = vunpack.c.l.b16 %v1203
      %v1240 = vunpack.c.l.b16 %v1204
      %v1241 = vunpack.c.l.b16 %v1205
      %v1242 = vunpack.c.l.b16 %v1206
      %v1243 = vunpack.c.l.b16 %v1207
      %v1244 = vunpack.c.l.b16 %v1208
      %v1245 = vunpack.c.l.b16 %v1209
      %v1246 = vunpack.c.l.b16 %v1210
      %v1247 = vunpack.c.l.b16 %v1211
      %v1248 = vunpack.c.l.b16 %v1212
      %v1249 = vunpack.c.l.b16 %v1213
      %v1250 = vunpack.c.l.b16 %v1214
      %v1251 = vunpack.c.l.b16 %v1215
      %v1252 = vunpack.c.l.b16 %v1216
      %v1253 = vunpack.c.l.b16 %v1217
      %v1254 = vunpack.c.l.b16 %v1218
      %v1255 = vpack.c.b16 %v1240, %v1239
      %v1256 = vpack.c.b16 %v1242, %v1241
      %v1257 = vpack.c.b16 %v1244, %v1243
      %v1258 = vpack.c.b16 %v1246, %v1245
      %v1259 = vpack.c.b16 %v1248, %v1247
      %v1260 = vpack.c.b16 %v1250, %v1249
      %v1261 = vpack.c.b16 %v1252, %v1251
      %v1262 = vpack.c.b16 %v1254, %v1253
      %1271 = vmatpush.bf16.msra.mxu0 %v1262
      %1272 = vmatpush.bf16.msra.mxu0 %v1261
      %1273 = vmatpush.bf16.msra.mxu0 %v1260
      %1274 = vmatpush.bf16.msra.mxu0 %v1259
      %1275 = vmatpush.bf16.msra.mxu0 %v1258
      %1276 = vmatpush.bf16.msra.mxu0 %v1257
      %1277 = vmatpush.bf16.msra.mxu0 %v1256
      %1278 = vmatpush.bf16.msra.mxu0 %v1255
      %1279 = vmatmul.bf16.gmra.mxu0 %v1202
      %v1280 = vpop.f32.mrf.mxu0
      %v1281 = vadd.f32 %v1221, %v1280
      %v1282 = vpop.f32.mrf.mxu0
      %1283 = vdwg.mxu0
      %v1284 = vmul.f32 %v1281, 0.5
      %v1285 = vtanh.pop %v1284
      %v1286 = vmul.f32 %v1285, 0.5
      %v1287 = vadd.f32 %v1286, 0.5
      %1288 = vst [vmem:[#allocation14] sm:$0xff] %v1287
    $region53: #{tpu_custom_call.1} parent=1 // pred_fallthru
      _
    // Predicated region
    $region54: #{tpu_custom_call.1} parent=1 // pred_check
      _
    $region55: #{tpu_custom_call.1} parent=1 // pred_check_branch
      %1290 = sbr.rel (0) target = $region57
    $region56: #{tpu_custom_call.1} parent=1 // pred_region
      %1292 = vsyncadd [#allocation7], 0
      %s1294 = sshll.u32 [#allocation14], 4
      %s1295 = int_to_ptr.vmem [resolvable:$true] %s1294
      %s1296 = sshll.u32 %s6, 4
      %s1297 = int_to_ptr.hbm [resolvable:$true] %s1296
      %1299 = dma.vmem_to_hbm [thread:$0]  %s1295, 128, %s1297, [#allocation7]
    $region57: #{tpu_custom_call.1} parent=1 // pred_fallthru
      _
    // Predicated region
    $region58: #{tpu_custom_call.1} parent=1 // pred_check
      _
    $region59: #{tpu_custom_call.1} parent=1 // pred_check_branch
      %1301 = sbr.rel (0) target = $region61
    $region60: #{tpu_custom_call.1} parent=1 // pred_region
      %1303 = dma.done [#allocation7], 128
    $region61: #{tpu_custom_call.1} parent=1 // pred_fallthru
      _
    %1304 = vsyncpa [#allocation6], 1
    %1305 = vsyncpa [#allocation9], 1
    %1306 = vsyncpa [#allocation12], 1
    %1307 = vsyncpa [#allocation7], 1

</llo_original>
